<compile_context>
chip_gen: v5e
topology: v5e:2x2
jax: 0.10.0
libtpu: 0.0.40
codegen_flags: <defaults>
</compile_context>

<pallas_src>
import functools
from math import exp

import numpy as np
import jax
import jax.numpy as jnp
from jax.experimental import pallas as pl
from jax.experimental.pallas import tpu as pltpu


# ---------------------------------------------------------------------------
# Parameter / constant construction (plain numpy — deterministic glue)
# ---------------------------------------------------------------------------
def _gaussian_1d(window_size: int, sigma: float) -> np.ndarray:
    g = np.array(
        [exp(-((x - window_size // 2) ** 2) / float(2 * sigma ** 2)) for x in range(window_size)],
        dtype=np.float64,
    )
    g = g / g.sum()
    return g.astype(np.float32)


def _band_matrix(n: int, g1d: np.ndarray, window_size: int) -> np.ndarray:
    """M[i, r] = g1d[r - i + pad]  (zero-padded 'same' conv as a banded matmul)."""
    pad = window_size // 2
    m = np.zeros((n, n), dtype=np.float32)
    for i in range(n):
        for r in range(n):
            a = r - i + pad
            if 0 <= a < window_size:
                m[i, r] = g1d[a]
    return m


# ---------------------------------------------------------------------------
# Pallas kernel: the whole MEF-SSIM hot path (batched conv, stats, gather, mean)
# ---------------------------------------------------------------------------
def _mef_ssim_kernel(x_ref, ys_ref, mh_ref, bd_ref, q_ref, *,
                     K, C, H, W, C1, C2, denom_g, denom_l, is_lum):
    CW = C * W
    KCW = K * CW
    off_x, off_x2 = 0, CW
    off_y, off_y2, off_xy = 2 * CW, 2 * CW + KCW, 2 * CW + 2 * KCW

    def recip(d):
        r = pl.reciprocal(d, approx=True)      # EUP seed — runs in the idle EUP slot
        return r * (2.0 - d * r)               # one Newton step -> ~exact f32 divide

    x = x_ref[...]          # (H, C*W)      lane-packed: c-major, w-minor
    y = ys_ref[...]         # (H, K*C*W)    lane-packed: k-major, c, w-minor

    # --- assemble the lane-packed conv-input slab (single lane concat) -------
    x_rep = jnp.concatenate([x] * K, axis=1)                   # (H, K*C*W)
    slab = jnp.concatenate([x, x * x, y, y * y, x_rep * y], axis=1)   # (H, n_ops*W)

    # --- batched separable Gaussian conv: 2 stacked lane-dense MXU matmuls ---
    #   rows (H) pass:   MH(H,H) @ SLAB(H, N*W)
    #   cols (W) pass:   result  @ kron(I_N, MW^T)(N*W, N*W)
    t = jnp.dot(mh_ref[...], slab, preferred_element_type=jnp.float32)
    conv = jnp.dot(t, bd_ref[...], preferred_element_type=jnp.float32)

    muX = conv[:, off_x:off_x + CW]                            # (H, C*W)
    sigX = conv[:, off_x2:off_x2 + CW] - muX * muX             # (H, C*W)

    inv_n_px = 1.0 / float(C * H * W)

    # --- stream over the K exposures: fold into running first-argmax select --
    best_sig = None
    best_cs = None
    if is_lum:
        num = jnp.zeros((H, CW), jnp.float32)
        den = jnp.zeros((H, CW), jnp.float32)

    for k in range(K):
        muY_k = conv[:, off_y + k * CW: off_y + (k + 1) * CW]
        sigY_k = conv[:, off_y2 + k * CW: off_y2 + (k + 1) * CW] - muY_k * muY_k
        sigXY_k = conv[:, off_xy + k * CW: off_xy + (k + 1) * CW] - muX * muY_k
        cs_k = (2.0 * sigXY_k + C2) * recip(sigX + sigY_k + C2)
        if k == 0:
            best_sig, best_cs = sigY_k, cs_k
        else:
            m = sigY_k > best_sig          # strict '>' keeps the first maximal k
            best_cs = jnp.where(m, cs_k, best_cs)
            best_sig = jnp.where(m, sigY_k, best_sig)

        if is_lum:
            lY_k = jnp.sum(muY_k) * inv_n_px                              # scalar per k
            lg_arg = -((lY_k - 0.5) ** 2) * (1.0 / denom_g)
            lG_k = jnp.exp(jnp.zeros((1, 1), jnp.float32) + lg_arg)       # 1 exp / k
            lL_k = jnp.exp(-((muY_k - 0.5) ** 2) * (1.0 / denom_l))
            LY_k = lG_k * lL_k
            num = num + LY_k * muY_k
            den = den + LY_k

    cs_map = best_cs                                           # (H, C*W)

    if is_lum:
        muYf = num * recip(den)
        l_map = (2.0 * muX * muYf + C1) * recip(muX * muX + muYf * muYf + C1)
        q_ref[0, 0] = jnp.sum(l_map * cs_map) * inv_n_px      # single reduction
    else:
        # l_map == 1.0  ->  q = mean(cs_map)
        q_ref[0, 0] = jnp.sum(cs_map) * inv_n_px              # single reduction


# ---------------------------------------------------------------------------
# Wrapper (equivalent of MEFSSIM.forward with default hyper-parameters)
# ---------------------------------------------------------------------------
def mef_ssim(X, Ys, *, window_size=11, sigma=1.5, sigma_g=0.2, sigma_l=0.2,
             c1=0.01, c2=0.03, is_lum=False):
    if X.ndim == 4:          # PyTorch passes X as (1, C, H, W)
        X = X[0]
    C, H, W = X.shape
    K = Ys.shape[0]
    assert Ys.shape == (K, C, H, W)

    n_ops = 2 * C + 3 * K * C                      # X, X*X, Y, Y*Y, X*Y images

    g1d = _gaussian_1d(window_size, sigma)
    MH = _band_matrix(H, g1d, window_size)                                  # (H, H)
    MWT = np.ascontiguousarray(_band_matrix(W, g1d, window_size).T)         # (W, W)
    # Block-diagonal W-pass operator for the whole lane-packed slab.
    # TODO(synk): at large W replace kron(I, MWT) (O((N*W)^2) VMEM/flops) with an
    # 11-tap masked pltpu.roll shifted-FMA column pass; at 16x16x3 the kron is tiny.
    BD = np.kron(np.eye(n_ops, dtype=np.float32), MWT)                      # (n_ops*W, n_ops*W)

    # Lane-pack the inputs in the wrapper (layout plumbing, done by XLA):
    #   X:  (C,H,W)   -> (H, C*W)
    #   Ys: (K,C,H,W) -> (H, K*C*W)   (k-major, c, w-minor — matches kernel offsets)
    Xp = jnp.transpose(X.astype(jnp.float32), (1, 0, 2)).reshape(H, C * W)
    Ysp = jnp.transpose(Ys.astype(jnp.float32), (2, 0, 1, 3)).reshape(H, K * C * W)

    kernel = functools.partial(
        _mef_ssim_kernel,
        K=K, C=C, H=H, W=W,
        C1=float(c1 ** 2), C2=float(c2 ** 2),
        denom_g=float(2 * sigma_g ** 2), denom_l=float(2 * sigma_l ** 2),
        is_lum=is_lum,
    )

    # TODO(synk): for HD-scale images switch to a row-tiled grid (halo = ws//2) with
    # pipelined BlockSpecs over Ys and dimension_semantics=("parallel",) so multiple
    # TensorCores split the rows; at 16x16x3 a single whole-image program is right.
    out = pl.pallas_call(
        kernel,
        out_shape=jax.ShapeDtypeStruct((1, 1), jnp.float32),
        in_specs=[pl.BlockSpec(memory_space=pltpu.MemorySpace.VMEM)] * 4,
        out_specs=pl.BlockSpec(memory_space=pltpu.MemorySpace.SMEM),
        compiler_params=pltpu.CompilerParams(vmem_limit_bytes=32 * 1024 * 1024),
    )(Xp, Ysp, jnp.asarray(MH), jnp.asarray(BD))
    return out[0, 0]


if __name__ == "__main__":
    key = jax.random.PRNGKey(0)
    k1, k2 = jax.random.split(key)
    C, H, W, K = 3, 16, 16, 3                      # channel=3 matches module default
    X = jax.random.uniform(k1, (1, C, H, W), dtype=jnp.float32)   # reference image
    Ys = jax.random.uniform(k2, (K, C, H, W), dtype=jnp.float32)  # exposure sequence

    q = mef_ssim(X, Ys)                            # default is_lum=False, like the module
    jax.block_until_ready(q)
    print("KERNEL_OK")
</pallas_src>

<mosaic_0001>
module attributes {stable_mosaic.version = 11 : i64} {
  func.func @_mef_ssim_kernel(%arg0: memref<16x48xf32, #tpu.memory_space<vmem>>, %arg1: memref<16x144xf32, #tpu.memory_space<vmem>>, %arg2: memref<16x16xf32, #tpu.memory_space<vmem>>, %arg3: memref<528x528xf32, #tpu.memory_space<vmem>>, %arg4: memref<1x1xf32, #tpu.memory_space<smem>>) attributes {dimension_semantics = [], scalar_prefetch = 0 : i64, scratch_operands = 0 : i64, tpu.core_type = #tpu.core_type<tc>} {
    %c0 = arith.constant 0 : index
    %c0_0 = arith.constant 0 : index
    %0 = vector.load %arg0[%c0, %c0_0] : memref<16x48xf32, #tpu.memory_space<vmem>>, vector<16x48xf32>
    %c0_1 = arith.constant 0 : index
    %c0_2 = arith.constant 0 : index
    %1 = vector.load %arg1[%c0_1, %c0_2] : memref<16x144xf32, #tpu.memory_space<vmem>>, vector<16x144xf32>
    %2 = tpu.concatenate %0, %0, %0 in 1 : vector<16x48xf32>, vector<16x48xf32>, vector<16x48xf32> -> vector<16x144xf32>
    %3 = arith.mulf %0, %0 : vector<16x48xf32>
    %4 = arith.mulf %1, %1 : vector<16x144xf32>
    %5 = arith.mulf %2, %1 : vector<16x144xf32>
    %6 = tpu.concatenate %0, %3, %1, %4, %5 in 1 : vector<16x48xf32>, vector<16x48xf32>, vector<16x144xf32>, vector<16x144xf32>, vector<16x144xf32> -> vector<16x528xf32>
    %c0_3 = arith.constant 0 : index
    %c0_4 = arith.constant 0 : index
    %7 = vector.load %arg2[%c0_3, %c0_4] : memref<16x16xf32, #tpu.memory_space<vmem>>, vector<16x16xf32>
    %cst = arith.constant dense<0.000000e+00> : vector<16x528xf32>
    %8 = tpu.matmul %7, %6, %cst {dimension_numbers = #tpu.dot_dimension_numbers<[1], [0], [0], [1], [0, 0, 1, 1], [], []>} : vector<16x16xf32>, vector<16x528xf32>, vector<16x528xf32> -> vector<16x528xf32>
    %c0_5 = arith.constant 0 : index
    %c0_6 = arith.constant 0 : index
    %9 = vector.load %arg3[%c0_5, %c0_6] : memref<528x528xf32, #tpu.memory_space<vmem>>, vector<528x528xf32>
    %cst_7 = arith.constant dense<0.000000e+00> : vector<16x528xf32>
    %10 = tpu.matmul %8, %9, %cst_7 {dimension_numbers = #tpu.dot_dimension_numbers<[1], [0], [0], [1], [0, 0, 1, 1], [], []>} : vector<16x528xf32>, vector<528x528xf32>, vector<16x528xf32> -> vector<16x528xf32>
    %11 = vector.extract_strided_slice %10 {offsets = [0, 0], sizes = [16, 48], strides = [1, 1]} : vector<16x528xf32> to vector<16x48xf32>
    %12 = vector.extract_strided_slice %10 {offsets = [0, 48], sizes = [16, 48], strides = [1, 1]} : vector<16x528xf32> to vector<16x48xf32>
    %13 = arith.mulf %11, %11 : vector<16x48xf32>
    %14 = arith.subf %12, %13 : vector<16x48xf32>
    %15 = vector.extract_strided_slice %10 {offsets = [0, 96], sizes = [16, 48], strides = [1, 1]} : vector<16x528xf32> to vector<16x48xf32>
    %16 = vector.extract_strided_slice %10 {offsets = [0, 240], sizes = [16, 48], strides = [1, 1]} : vector<16x528xf32> to vector<16x48xf32>
    %17 = arith.mulf %15, %15 : vector<16x48xf32>
    %18 = arith.subf %16, %17 : vector<16x48xf32>
    %19 = vector.extract_strided_slice %10 {offsets = [0, 384], sizes = [16, 48], strides = [1, 1]} : vector<16x528xf32> to vector<16x48xf32>
    %20 = arith.mulf %11, %15 : vector<16x48xf32>
    %21 = arith.subf %19, %20 : vector<16x48xf32>
    %cst_8 = arith.constant 2.000000e+00 : f32
    %22 = vector.broadcast %cst_8 : f32 to vector<16x48xf32>
    %23 = arith.mulf %22, %21 : vector<16x48xf32>
    %cst_9 = arith.constant 8.99999984E-4 : f32
    %24 = vector.broadcast %cst_9 : f32 to vector<16x48xf32>
    %25 = arith.addf %23, %24 : vector<16x48xf32>
    %26 = arith.addf %14, %18 : vector<16x48xf32>
    %cst_10 = arith.constant 8.99999984E-4 : f32
    %27 = vector.broadcast %cst_10 : f32 to vector<16x48xf32>
    %28 = arith.addf %26, %27 : vector<16x48xf32>
    %29 = tpu.reciprocal %28 {approx = true} : vector<16x48xf32> -> vector<16x48xf32>
    %30 = arith.mulf %28, %29 : vector<16x48xf32>
    %cst_11 = arith.constant 2.000000e+00 : f32
    %31 = vector.broadcast %cst_11 : f32 to vector<16x48xf32>
    %32 = arith.subf %31, %30 : vector<16x48xf32>
    %33 = arith.mulf %29, %32 : vector<16x48xf32>
    %34 = arith.mulf %25, %33 : vector<16x48xf32>
    %35 = vector.extract_strided_slice %10 {offsets = [0, 144], sizes = [16, 48], strides = [1, 1]} : vector<16x528xf32> to vector<16x48xf32>
    %36 = vector.extract_strided_slice %10 {offsets = [0, 288], sizes = [16, 48], strides = [1, 1]} : vector<16x528xf32> to vector<16x48xf32>
    %37 = arith.mulf %35, %35 : vector<16x48xf32>
    %38 = arith.subf %36, %37 : vector<16x48xf32>
    %39 = vector.extract_strided_slice %10 {offsets = [0, 432], sizes = [16, 48], strides = [1, 1]} : vector<16x528xf32> to vector<16x48xf32>
    %40 = arith.mulf %11, %35 : vector<16x48xf32>
    %41 = arith.subf %39, %40 : vector<16x48xf32>
    %cst_12 = arith.constant 2.000000e+00 : f32
    %42 = vector.broadcast %cst_12 : f32 to vector<16x48xf32>
    %43 = arith.mulf %42, %41 : vector<16x48xf32>
    %cst_13 = arith.constant 8.99999984E-4 : f32
    %44 = vector.broadcast %cst_13 : f32 to vector<16x48xf32>
    %45 = arith.addf %43, %44 : vector<16x48xf32>
    %46 = arith.addf %14, %38 : vector<16x48xf32>
    %cst_14 = arith.constant 8.99999984E-4 : f32
    %47 = vector.broadcast %cst_14 : f32 to vector<16x48xf32>
    %48 = arith.addf %46, %47 : vector<16x48xf32>
    %49 = tpu.reciprocal %48 {approx = true} : vector<16x48xf32> -> vector<16x48xf32>
    %50 = arith.mulf %48, %49 : vector<16x48xf32>
    %cst_15 = arith.constant 2.000000e+00 : f32
    %51 = vector.broadcast %cst_15 : f32 to vector<16x48xf32>
    %52 = arith.subf %51, %50 : vector<16x48xf32>
    %53 = arith.mulf %49, %52 : vector<16x48xf32>
    %54 = arith.mulf %45, %53 : vector<16x48xf32>
    %55 = arith.cmpf ogt, %38, %18 : vector<16x48xf32>
    %56 = arith.select %55, %54, %34 : vector<16x48xi1>, vector<16x48xf32>
    %57 = arith.select %55, %38, %18 : vector<16x48xi1>, vector<16x48xf32>
    %58 = vector.extract_strided_slice %10 {offsets = [0, 192], sizes = [16, 48], strides = [1, 1]} : vector<16x528xf32> to vector<16x48xf32>
    %59 = vector.extract_strided_slice %10 {offsets = [0, 336], sizes = [16, 48], strides = [1, 1]} : vector<16x528xf32> to vector<16x48xf32>
    %60 = arith.mulf %58, %58 : vector<16x48xf32>
    %61 = arith.subf %59, %60 : vector<16x48xf32>
    %62 = vector.extract_strided_slice %10 {offsets = [0, 480], sizes = [16, 48], strides = [1, 1]} : vector<16x528xf32> to vector<16x48xf32>
    %63 = arith.mulf %11, %58 : vector<16x48xf32>
    %64 = arith.subf %62, %63 : vector<16x48xf32>
    %cst_16 = arith.constant 2.000000e+00 : f32
    %65 = vector.broadcast %cst_16 : f32 to vector<16x48xf32>
    %66 = arith.mulf %65, %64 : vector<16x48xf32>
    %cst_17 = arith.constant 8.99999984E-4 : f32
    %67 = vector.broadcast %cst_17 : f32 to vector<16x48xf32>
    %68 = arith.addf %66, %67 : vector<16x48xf32>
    %69 = arith.addf %14, %61 : vector<16x48xf32>
    %cst_18 = arith.constant 8.99999984E-4 : f32
    %70 = vector.broadcast %cst_18 : f32 to vector<16x48xf32>
    %71 = arith.addf %69, %70 : vector<16x48xf32>
    %72 = tpu.reciprocal %71 {approx = true} : vector<16x48xf32> -> vector<16x48xf32>
    %73 = arith.mulf %71, %72 : vector<16x48xf32>
    %cst_19 = arith.constant 2.000000e+00 : f32
    %74 = vector.broadcast %cst_19 : f32 to vector<16x48xf32>
    %75 = arith.subf %74, %73 : vector<16x48xf32>
    %76 = arith.mulf %72, %75 : vector<16x48xf32>
    %77 = arith.mulf %68, %76 : vector<16x48xf32>
    %78 = arith.cmpf ogt, %61, %57 : vector<16x48xf32>
    %79 = arith.select %78, %77, %56 : vector<16x48xi1>, vector<16x48xf32>
    %80 = vector.shape_cast %79 : vector<16x48xf32> to vector<1x16x48xf32>
    %cst_20 = arith.constant dense<0.000000e+00> : vector<1xf32>
    %81 = vector.multi_reduction <add>, %80, %cst_20 [1, 2] : vector<1x16x48xf32> to vector<1xf32>
    %82 = vector.shape_cast %81 : vector<1xf32> to vector<1x1x1xf32>
    %83 = vector.extract %82[0, 0, 0] : f32 from vector<1x1x1xf32>
    %cst_21 = arith.constant 0.00130208337 : f32
    %84 = arith.mulf %83, %cst_21 : f32
    %c0_22 = arith.constant 0 : index
    %c0_23 = arith.constant 0 : index
    %85 = memref.load %arg4[%c0_22, %c0_23] : memref<1x1xf32, #tpu.memory_space<smem>>
    memref.store %84, %arg4[%c0_22, %c0_23] : memref<1x1xf32, #tpu.memory_space<smem>>
    return
  }
}

</mosaic_0001>

<llo_original>
// kernel: tpu_custom_call.1
$region0: #{tpu_custom_call.1}
  #allocation0 [shape = 'u32[]', space=smem, size = 0x4, offset = 0x4, fixed_abs, tag = 'smem constant byte address 0x4 - core index']
  #allocation1 [shape = 'u32[72,128]{1,0:T(1,128)}', space=vmem, size = 0x9000, scoped, tag = 'internal scratch']
  %s0 = inlined_call_operand.hbm [shape: f32[16,48], index: 0, kind: input, shape index: {}]
  %s1 = inlined_call_operand.hbm [shape: f32[16,144], index: 1, kind: input, shape index: {}]
  %s2 = inlined_call_operand.hbm [shape: f32[16,16], index: 2, kind: input, shape index: {}]
  %s3 = inlined_call_operand.hbm [shape: f32[528,528], index: 3, kind: input, shape index: {}]
  %s4 = inlined_call_operand.hbm [shape: f32[1,1], index: 4, kind: output, shape index: {}]
  %s5 = sld [smem:[#allocation0]]
  $region42: #{tpu_custom_call.1} parent=0
    _
  %s7 = ssub.s32 1, %s5
  %s8 = scalar_select 0, %s7, %s5
  $region1: #{tpu_custom_call.1} parent=0
    #allocation2 [shape = 'u8[8192]{0}', space=vmem, size = 0x2000, scoped, tag = 'input window, operand 0, single buffered']
    #allocation3 [shape = 's32[1]{0}', space=sflag, size = 0x4, scoped, tag = 'scoped memory for tpu_custom_call.1']
    #allocation4 [shape = 's32[1]{0}', space=sflag, size = 0x4, scoped, tag = 'scoped memory for tpu_custom_call.1']
    #allocation5 [shape = 'u8[16384]{0}', space=vmem, size = 0x4000, scoped, tag = 'input window, operand 1, single buffered']
    #allocation6 [shape = 's32[1]{0}', space=sflag, size = 0x4, scoped, tag = 'scoped memory for tpu_custom_call.1']
    #allocation7 [shape = 'u8[8192]{0}', space=vmem, size = 0x2000, scoped, tag = 'input window, operand 2, single buffered']
    #allocation8 [shape = 'u8[1351680]{0}', space=vmem, size = 0x14a000, scoped, tag = 'input window, operand 3, single buffered']
    #allocation9 [shape = 's32[1]{0}', space=sflag, size = 0x4, scoped, tag = 'scoped memory for tpu_custom_call.1']
    #allocation10 [shape = 'u8[512]{0}', space=smem, size = 0x200, scoped, tag = 'output window, operand 0, single buffered']
    %9 = vsyncpa [#allocation3], 0
    %10 = vsyncpa [#allocation6], 0
    %11 = vsyncpa [#allocation9], 0
    %12 = vsyncpa [#allocation4], 0
    // Predicated region
    $region2: #{tpu_custom_call.1} parent=1 // pred_check
      _
    $region3: #{tpu_custom_call.1} parent=1 // pred_check_branch
      %14 = sbr.rel (0) target = $region5
    $region4: #{tpu_custom_call.1} parent=1 // pred_region
      %16 = vsyncadd [#allocation3], 0
      %s17 = sshll.u32 %s0, 4
      %s18 = int_to_ptr.hbm [resolvable:$true] %s17
      %s19 = sshll.u32 [#allocation2], 4
      %s20 = int_to_ptr.vmem [resolvable:$true] %s19
      %25 = dma.hbm_to_vmem [thread:$0]  %s18, 256, %s20, [#allocation3], 128, 128, 8
    $region5: #{tpu_custom_call.1} parent=1 // pred_fallthru
      _
    // Predicated region
    $region6: #{tpu_custom_call.1} parent=1 // pred_check
      _
    $region7: #{tpu_custom_call.1} parent=1 // pred_check_branch
      %27 = sbr.rel (0) target = $region9
    $region8: #{tpu_custom_call.1} parent=1 // pred_region
      %29 = vsyncadd [#allocation6], 0
      %s30 = sshll.u32 %s1, 4
      %s31 = int_to_ptr.hbm [resolvable:$true] %s30
      %s32 = sshll.u32 [#allocation5], 4
      %s33 = int_to_ptr.vmem [resolvable:$true] %s32
      %38 = dma.hbm_to_vmem [thread:$0]  %s31, 512, %s33, [#allocation6], 256, 256, 16
    $region9: #{tpu_custom_call.1} parent=1 // pred_fallthru
      _
    // Predicated region
    $region10: #{tpu_custom_call.1} parent=1 // pred_check
      _
    $region11: #{tpu_custom_call.1} parent=1 // pred_check_branch
      %40 = sbr.rel (0) target = $region13
    $region12: #{tpu_custom_call.1} parent=1 // pred_region
      %42 = vsyncadd [#allocation6], 0
      %s43 = sshll.u32 %s2, 4
      %s44 = int_to_ptr.hbm [resolvable:$true] %s43
      %s45 = sshll.u32 [#allocation7], 4
      %s46 = int_to_ptr.vmem [resolvable:$true] %s45
      %51 = dma.hbm_to_vmem [thread:$0]  %s44, 256, %s46, [#allocation6], 128, 128, 8
    $region13: #{tpu_custom_call.1} parent=1 // pred_fallthru
      _
    // Predicated region
    $region14: #{tpu_custom_call.1} parent=1 // pred_check
      _
    $region15: #{tpu_custom_call.1} parent=1 // pred_check_branch
      %53 = sbr.rel (0) target = $region17
    $region16: #{tpu_custom_call.1} parent=1 // pred_region
      %55 = vsyncadd [#allocation9], 0
      %s56 = sshll.u32 %s3, 4
      %s57 = int_to_ptr.hbm [resolvable:$true] %s56
      %s58 = sshll.u32 [#allocation8], 4
      %s59 = int_to_ptr.vmem [resolvable:$true] %s58
      %64 = dma.hbm_to_vmem [thread:$0]  %s57, 42240, %s59, [#allocation9], 640, 640, 40
    $region17: #{tpu_custom_call.1} parent=1 // pred_fallthru
      _
    // Predicated region
    $region18: #{tpu_custom_call.1} parent=1 // pred_check
      _
    $region19: #{tpu_custom_call.1} parent=1 // pred_check_branch
      %66 = sbr.rel (0) target = $region21
    $region20: #{tpu_custom_call.1} parent=1 // pred_region
      %68 = dma.done [#allocation3], 256
    $region21: #{tpu_custom_call.1} parent=1 // pred_fallthru
      _
    // Predicated region
    $region22: #{tpu_custom_call.1} parent=1 // pred_check
      _
    $region23: #{tpu_custom_call.1} parent=1 // pred_check_branch
      %70 = sbr.rel (0) target = $region25
    $region24: #{tpu_custom_call.1} parent=1 // pred_region
      %72 = dma.done [#allocation6], 512
    $region25: #{tpu_custom_call.1} parent=1 // pred_fallthru
      _
    // Predicated region
    $region26: #{tpu_custom_call.1} parent=1 // pred_check
      _
    $region27: #{tpu_custom_call.1} parent=1 // pred_check_branch
      %74 = sbr.rel (0) target = $region29
    $region28: #{tpu_custom_call.1} parent=1 // pred_region
      %76 = dma.done [#allocation6], 256
    $region29: #{tpu_custom_call.1} parent=1 // pred_fallthru
      _
    // Predicated region
    $region30: #{tpu_custom_call.1} parent=1 // pred_check
      _
    $region31: #{tpu_custom_call.1} parent=1 // pred_check_branch
      %78 = sbr.rel (0) target = $region33
    $region32: #{tpu_custom_call.1} parent=1 // pred_region
      %80 = dma.done [#allocation9], 42240
    $region33: #{tpu_custom_call.1} parent=1 // pred_fallthru
      _
    %v81 = vld [vmem:[#allocation2] sm:$0xff]
    %v82 = vld [vmem:[#allocation2 + $0x8] sm:$0xff]
    %v83 = vld [vmem:[#allocation5] sm:$0xff]
    %v84 = vld [vmem:[#allocation5 + $0x8] sm:$0xff]
    %v85 = vld [vmem:[#allocation5 + $0x10] sm:$0xff]
    %v86 = vld [vmem:[#allocation5 + $0x18] sm:$0xff]
    %89 = vrot.lane.b32.xlu0 %v81, 48
    %v90 = vpop.permute.xlu0 %89
    %91 = vrot.lane.b32.xlu0 %v82, 48
    %v92 = vpop.permute.xlu0 %91
    %95 = vrot.lane.b32.xlu0 %v81, 96
    %v96 = vpop.permute.xlu0 %95
    %97 = vrot.lane.b32.xlu0 %v82, 96
    %v98 = vpop.permute.xlu0 %97
    %vm101 = vcmask 392192
    %v102 = vsel %vm101, %v81, %v90
    %v103 = vsel %vm101, %v82, %v92
    %vm104 = vcmask 785408
    %v105 = vsel %vm104, %v102, %v96
    %v106 = vsel %vm104, %v103, %v98
    %v107 = vmul.f32 %v81, %v81
    %v108 = vmul.f32 %v82, %v82
    %v109 = vmul.f32 %v83, %v83
    %v110 = vmul.f32 %v84, %v84
    %v111 = vmul.f32 %v85, %v85
    %v112 = vmul.f32 %v86, %v86
    %v113 = vmul.f32 %v105, %v83
    %v114 = vmul.f32 %v96, %v84
    %v115 = vmul.f32 %v106, %v85
    %v116 = vmul.f32 %v98, %v86
    %119 = vrot.lane.b32.xlu0 %v107, 48
    %v120 = vpop.permute.xlu0 %119
    %121 = vrot.lane.b32.xlu0 %v108, 48
    %v122 = vpop.permute.xlu0 %121
    %129 = vrot.lane.b32.xlu0 %v83, 96
    %v130 = vpop.permute.xlu0 %129
    %131 = vrot.lane.b32.xlu0 %v84, 96
    %v132 = vpop.permute.xlu0 %131
    %133 = vrot.lane.b32.xlu0 %v85, 96
    %v134 = vpop.permute.xlu0 %133
    %135 = vrot.lane.b32.xlu0 %v86, 96
    %v136 = vpop.permute.xlu0 %135
    %v137 = vsel %vm104, %v130, %v132
    %v138 = vsel %vm104, %v134, %v136
    %147 = vrot.lane.b32.xlu0 %v109, 112
    %v148 = vpop.permute.xlu0 %147
    %149 = vrot.lane.b32.xlu0 %v110, 112
    %v150 = vpop.permute.xlu0 %149
    %151 = vrot.lane.b32.xlu0 %v111, 112
    %v152 = vpop.permute.xlu0 %151
    %153 = vrot.lane.b32.xlu0 %v112, 112
    %v154 = vpop.permute.xlu0 %153
    %vm155 = vcmask 916480
    %v156 = vsel %vm155, %v148, %v150
    %v157 = vsel %vm155, %v152, %v154
    %v162 = vsel %vm101, %v81, %v120
    %v163 = vsel %vm101, %v82, %v122
    %v164 = vsel %vm104, %v162, %v130
    %v165 = vsel %vm104, %v163, %v134
    %v166 = vsel %vm155, %v137, %v148
    %v167 = vsel %vm155, %v138, %v152
    %v168 = vld [vmem:[#allocation7] sm:$0xff]
    %v169 = vld [vmem:[#allocation7 + $0x8] sm:$0xff]
    %vm170 = vcmask 130048
    %v172 = vsel %vm170, %v168, 0
    %v175 = vsel %vm170, %v169, 0
    %177 = vmatpush.msra.mxu0 0.0
    %178 = vmatpush.msra.mxu0 0.0
    %179 = vmatpush.msra.mxu0 0.0
    %180 = vmatpush.msra.mxu0 0.0
    %181 = vmatpush.msra.mxu0 0.0
    %182 = vmatpush.msra.mxu0 0.0
    %183 = vmatpush.msra.mxu0 0.0
    %184 = vmatpush.msra.mxu0 0.0
    %185 = vmatpush.msra.mxu0 0.0
    %186 = vmatpush.msra.mxu0 0.0
    %187 = vmatpush.msra.mxu0 0.0
    %188 = vmatpush.msra.mxu0 0.0
    %189 = vmatpush.msra.mxu0 0.0
    %190 = vmatpush.msra.mxu0 0.0
    %191 = vmatpush.msra.mxu0 %v165
    %192 = vmatpush.msra.mxu0 %v164
    %193 = vmatmul.f32.gmra.mxu0 %v172
    %v194 = vpop.f32.mrf.mxu0
    %v195 = vadd.f32 0.0, %v194
    %196 = vmatmul.f32.gmra.mxu0 %v175
    %v197 = vpop.f32.mrf.mxu0
    %v198 = vadd.f32 0.0, %v197
    %199 = vdwg.mxu0
    %200 = vmatpush.msra.mxu0 0.0
    %201 = vmatpush.msra.mxu0 0.0
    %202 = vmatpush.msra.mxu0 0.0
    %203 = vmatpush.msra.mxu0 0.0
    %204 = vmatpush.msra.mxu0 0.0
    %205 = vmatpush.msra.mxu0 0.0
    %206 = vmatpush.msra.mxu0 0.0
    %207 = vmatpush.msra.mxu0 0.0
    %208 = vmatpush.msra.mxu0 0.0
    %209 = vmatpush.msra.mxu0 0.0
    %210 = vmatpush.msra.mxu0 0.0
    %211 = vmatpush.msra.mxu0 0.0
    %212 = vmatpush.msra.mxu0 0.0
    %213 = vmatpush.msra.mxu0 0.0
    %214 = vmatpush.msra.mxu0 %v167
    %215 = vmatpush.msra.mxu0 %v166
    %216 = vmatmul.f32.gmra.mxu0 %v172
    %v217 = vpop.f32.mrf.mxu0
    %v218 = vadd.f32 0.0, %v217
    %219 = vmatmul.f32.gmra.mxu0 %v175
    %v220 = vpop.f32.mrf.mxu0
    %v221 = vadd.f32 0.0, %v220
    %222 = vdwg.mxu0
    %223 = vmatpush.msra.mxu0 0.0
    %224 = vmatpush.msra.mxu0 0.0
    %225 = vmatpush.msra.mxu0 0.0
    %226 = vmatpush.msra.mxu0 0.0
    %227 = vmatpush.msra.mxu0 0.0
    %228 = vmatpush.msra.mxu0 0.0
    %229 = vmatpush.msra.mxu0 0.0
    %230 = vmatpush.msra.mxu0 0.0
    %231 = vmatpush.msra.mxu0 0.0
    %232 = vmatpush.msra.mxu0 0.0
    %233 = vmatpush.msra.mxu0 0.0
    %234 = vmatpush.msra.mxu0 0.0
    %235 = vmatpush.msra.mxu0 0.0
    %236 = vmatpush.msra.mxu0 0.0
    %237 = vmatpush.msra.mxu0 %v157
    %238 = vmatpush.msra.mxu0 %v156
    %239 = vmatmul.f32.gmra.mxu0 %v172
    %v240 = vpop.f32.mrf.mxu0
    %v241 = vadd.f32 0.0, %v240
    %242 = vmatmul.f32.gmra.mxu0 %v175
    %v243 = vpop.f32.mrf.mxu0
    %v244 = vadd.f32 0.0, %v243
    %245 = vdwg.mxu0
    %246 = vmatpush.msra.mxu0 0.0
    %247 = vmatpush.msra.mxu0 0.0
    %248 = vmatpush.msra.mxu0 0.0
    %249 = vmatpush.msra.mxu0 0.0
    %250 = vmatpush.msra.mxu0 0.0
    %251 = vmatpush.msra.mxu0 0.0
    %252 = vmatpush.msra.mxu0 0.0
    %253 = vmatpush.msra.mxu0 0.0
    %254 = vmatpush.msra.mxu0 0.0
    %255 = vmatpush.msra.mxu0 0.0
    %256 = vmatpush.msra.mxu0 0.0
    %257 = vmatpush.msra.mxu0 0.0
    %258 = vmatpush.msra.mxu0 0.0
    %259 = vmatpush.msra.mxu0 0.0
    %260 = vmatpush.msra.mxu0 %v115
    %261 = vmatpush.msra.mxu0 %v113
    %262 = vmatmul.f32.gmra.mxu0 %v172
    %v263 = vpop.f32.mrf.mxu0
    %v264 = vadd.f32 0.0, %v263
    %265 = vmatmul.f32.gmra.mxu0 %v175
    %v266 = vpop.f32.mrf.mxu0
    %v267 = vadd.f32 0.0, %v266
    %268 = vdwg.mxu0
    %269 = vmatpush.msra.mxu0 0.0
    %270 = vmatpush.msra.mxu0 0.0
    %271 = vmatpush.msra.mxu0 0.0
    %272 = vmatpush.msra.mxu0 0.0
    %273 = vmatpush.msra.mxu0 0.0
    %274 = vmatpush.msra.mxu0 0.0
    %275 = vmatpush.msra.mxu0 0.0
    %276 = vmatpush.msra.mxu0 0.0
    %277 = vmatpush.msra.mxu0 0.0
    %278 = vmatpush.msra.mxu0 0.0
    %279 = vmatpush.msra.mxu0 0.0
    %280 = vmatpush.msra.mxu0 0.0
    %281 = vmatpush.msra.mxu0 0.0
    %282 = vmatpush.msra.mxu0 0.0
    %283 = vmatpush.msra.mxu0 %v116
    %284 = vmatpush.msra.mxu0 %v114
    %285 = vmatmul.f32.gmra.mxu0 %v172
    %v286 = vpop.f32.mrf.mxu0
    %v287 = vadd.f32 0.0, %v286
    %288 = vmatmul.f32.gmra.mxu0 %v175
    %v289 = vpop.f32.mrf.mxu0
    %v290 = vadd.f32 0.0, %v289
    %291 = vdwg.mxu0
    %v292 = vld [vmem:[#allocation8] sm:$0xff]
    %v293 = vld [vmem:[#allocation8 + $0x8] sm:$0xff]
    %v294 = vld [vmem:[#allocation8 + $0x10] sm:$0xff]
    %v295 = vld [vmem:[#allocation8 + $0x18] sm:$0xff]
    %v296 = vld [vmem:[#allocation8 + $0x20] sm:$0xff]
    %v297 = vld [vmem:[#allocation8 + $0x28] sm:$0xff]
    %v298 = vld [vmem:[#allocation8 + $0x30] sm:$0xff]
    %v299 = vld [vmem:[#allocation8 + $0x38] sm:$0xff]
    %v300 = vld [vmem:[#allocation8 + $0x40] sm:$0xff]
    %v301 = vld [vmem:[#allocation8 + $0x48] sm:$0xff]
    %v302 = vld [vmem:[#allocation8 + $0x50] sm:$0xff]
    %v303 = vld [vmem:[#allocation8 + $0x58] sm:$0xff]
    %v304 = vld [vmem:[#allocation8 + $0x60] sm:$0xff]
    %v305 = vld [vmem:[#allocation8 + $0x68] sm:$0xff]
    %v306 = vld [vmem:[#allocation8 + $0x70] sm:$0xff]
    %v307 = vld [vmem:[#allocation8 + $0x78] sm:$0xff]
    %v308 = vld [vmem:[#allocation8 + $0x80] sm:$0xff]
    %v309 = vld [vmem:[#allocation8 + $0x88] sm:$0xff]
    %v310 = vld [vmem:[#allocation8 + $0x90] sm:$0xff]
    %v311 = vld [vmem:[#allocation8 + $0x98] sm:$0xff]
    %v312 = vld [vmem:[#allocation8 + $0xa0] sm:$0xff]
    %v313 = vld [vmem:[#allocation8 + $0xa8] sm:$0xff]
    %v314 = vld [vmem:[#allocation8 + $0xb0] sm:$0xff]
    %v315 = vld [vmem:[#allocation8 + $0xb8] sm:$0xff]
    %v316 = vld [vmem:[#allocation8 + $0xc0] sm:$0xff]
    %v317 = vld [vmem:[#allocation8 + $0xc8] sm:$0xff]
    %v318 = vld [vmem:[#allocation8 + $0xd0] sm:$0xff]
    %v319 = vld [vmem:[#allocation8 + $0xd8] sm:$0xff]
    %v320 = vld [vmem:[#allocation8 + $0xe0] sm:$0xff]
    %v321 = vld [vmem:[#allocation8 + $0xe8] sm:$0xff]
    %v322 = vld [vmem:[#allocation8 + $0xf0] sm:$0xff]
    %v323 = vld [vmem:[#allocation8 + $0xf8] sm:$0xff]
    %v324 = vld [vmem:[#allocation8 + $0x100] sm:$0xff]
    %v325 = vld [vmem:[#allocation8 + $0x108] sm:$0xff]
    %v326 = vld [vmem:[#allocation8 + $0x110] sm:$0xff]
    %v327 = vld [vmem:[#allocation8 + $0x118] sm:$0xff]
    %v328 = vld [vmem:[#allocation8 + $0x120] sm:$0xff]
    %v329 = vld [vmem:[#allocation8 + $0x128] sm:$0xff]
    %v330 = vld [vmem:[#allocation8 + $0x130] sm:$0xff]
    %v331 = vld [vmem:[#allocation8 + $0x138] sm:$0xff]
    %v332 = vld [vmem:[#allocation8 + $0x140] sm:$0xff]
    %v333 = vld [vmem:[#allocation8 + $0x148] sm:$0xff]
    %v334 = vld [vmem:[#allocation8 + $0x150] sm:$0xff]
    %v335 = vld [vmem:[#allocation8 + $0x158] sm:$0xff]
    %v336 = vld [vmem:[#allocation8 + $0x160] sm:$0xff]
    %v337 = vld [vmem:[#allocation8 + $0x168] sm:$0xff]
    %v338 = vld [vmem:[#allocation8 + $0x170] sm:$0xff]
    %v339 = vld [vmem:[#allocation8 + $0x178] sm:$0xff]
    %v340 = vld [vmem:[#allocation8 + $0x180] sm:$0xff]
    %v341 = vld [vmem:[#allocation8 + $0x188] sm:$0xff]
    %v342 = vld [vmem:[#allocation8 + $0x190] sm:$0xff]
    %v343 = vld [vmem:[#allocation8 + $0x198] sm:$0xff]
    %v344 = vld [vmem:[#allocation8 + $0x1a0] sm:$0xff]
    %v345 = vld [vmem:[#allocation8 + $0x1a8] sm:$0xff]
    %v346 = vld [vmem:[#allocation8 + $0x1b0] sm:$0xff]
    %v347 = vld [vmem:[#allocation8 + $0x1b8] sm:$0xff]
    %v348 = vld [vmem:[#allocation8 + $0x1c0] sm:$0xff]
    %v349 = vld [vmem:[#allocation8 + $0x1c8] sm:$0xff]
    %v350 = vld [vmem:[#allocation8 + $0x1d0] sm:$0xff]
    %v351 = vld [vmem:[#allocation8 + $0x1d8] sm:$0xff]
    %v352 = vld [vmem:[#allocation8 + $0x1e0] sm:$0xff]
    %v353 = vld [vmem:[#allocation8 + $0x1e8] sm:$0xff]
    %v354 = vld [vmem:[#allocation8 + $0x1f0] sm:$0xff]
    %v355 = vld [vmem:[#allocation8 + $0x1f8] sm:$0xff]
    %v356 = vld [vmem:[#allocation8 + $0x200] sm:$0xff]
    %v357 = vld [vmem:[#allocation8 + $0x208] sm:$0xff]
    %v358 = vld [vmem:[#allocation8 + $0x210] sm:$0xff]
    %v359 = vld [vmem:[#allocation8 + $0x218] sm:$0xff]
    %v360 = vld [vmem:[#allocation8 + $0x220] sm:$0xff]
    %v361 = vld [vmem:[#allocation8 + $0x228] sm:$0xff]
    %v362 = vld [vmem:[#allocation8 + $0x230] sm:$0xff]
    %v363 = vld [vmem:[#allocation8 + $0x238] sm:$0xff]
    %v364 = vld [vmem:[#allocation8 + $0x240] sm:$0xff]
    %v365 = vld [vmem:[#allocation8 + $0x248] sm:$0xff]
    %v366 = vld [vmem:[#allocation8 + $0x250] sm:$0xff]
    %v367 = vld [vmem:[#allocation8 + $0x258] sm:$0xff]
    %v368 = vld [vmem:[#allocation8 + $0x260] sm:$0xff]
    %v369 = vld [vmem:[#allocation8 + $0x268] sm:$0xff]
    %v370 = vld [vmem:[#allocation8 + $0x270] sm:$0xff]
    %v371 = vld [vmem:[#allocation8 + $0x278] sm:$0xff]
    %v372 = vld [vmem:[#allocation8 + $0x280] sm:$0xff]
    %v373 = vld [vmem:[#allocation8 + $0x288] sm:$0xff]
    %v374 = vld [vmem:[#allocation8 + $0x290] sm:$0xff]
    %v375 = vld [vmem:[#allocation8 + $0x298] sm:$0xff]
    %v376 = vld [vmem:[#allocation8 + $0x2a0] sm:$0xff]
    %v377 = vld [vmem:[#allocation8 + $0x2a8] sm:$0xff]
    %v378 = vld [vmem:[#allocation8 + $0x2b0] sm:$0xff]
    %v379 = vld [vmem:[#allocation8 + $0x2b8] sm:$0xff]
    %v380 = vld [vmem:[#allocation8 + $0x2c0] sm:$0xff]
    %v381 = vld [vmem:[#allocation8 + $0x2c8] sm:$0xff]
    %v382 = vld [vmem:[#allocation8 + $0x2d0] sm:$0xff]
    %v383 = vld [vmem:[#allocation8 + $0x2d8] sm:$0xff]
    %v384 = vld [vmem:[#allocation8 + $0x2e0] sm:$0xff]
    %v385 = vld [vmem:[#allocation8 + $0x2e8] sm:$0xff]
    %v386 = vld [vmem:[#allocation8 + $0x2f0] sm:$0xff]
    %v387 = vld [vmem:[#allocation8 + $0x2f8] sm:$0xff]
    %v388 = vld [vmem:[#allocation8 + $0x300] sm:$0xff]
    %v389 = vld [vmem:[#allocation8 + $0x308] sm:$0xff]
    %v390 = vld [vmem:[#allocation8 + $0x310] sm:$0xff]
    %v391 = vld [vmem:[#allocation8 + $0x318] sm:$0xff]
    %v392 = vld [vmem:[#allocation8 + $0x320] sm:$0xff]
    %v393 = vld [vmem:[#allocation8 + $0x328] sm:$0xff]
    %v394 = vld [vmem:[#allocation8 + $0x330] sm:$0xff]
    %v395 = vld [vmem:[#allocation8 + $0x338] sm:$0xff]
    %v396 = vld [vmem:[#allocation8 + $0x340] sm:$0xff]
    %v397 = vld [vmem:[#allocation8 + $0x348] sm:$0xff]
    %v398 = vld [vmem:[#allocation8 + $0x350] sm:$0xff]
    %v399 = vld [vmem:[#allocation8 + $0x358] sm:$0xff]
    %v400 = vld [vmem:[#allocation8 + $0x360] sm:$0xff]
    %v401 = vld [vmem:[#allocation8 + $0x368] sm:$0xff]
    %v402 = vld [vmem:[#allocation8 + $0x370] sm:$0xff]
    %v403 = vld [vmem:[#allocation8 + $0x378] sm:$0xff]
    %v404 = vld [vmem:[#allocation8 + $0x380] sm:$0xff]
    %v405 = vld [vmem:[#allocation8 + $0x388] sm:$0xff]
    %v406 = vld [vmem:[#allocation8 + $0x390] sm:$0xff]
    %v407 = vld [vmem:[#allocation8 + $0x398] sm:$0xff]
    %v408 = vld [vmem:[#allocation8 + $0x3a0] sm:$0xff]
    %v409 = vld [vmem:[#allocation8 + $0x3a8] sm:$0xff]
    %v410 = vld [vmem:[#allocation8 + $0x3b0] sm:$0xff]
    %v411 = vld [vmem:[#allocation8 + $0x3b8] sm:$0xff]
    %v412 = vld [vmem:[#allocation8 + $0x3c0] sm:$0xff]
    %v413 = vld [vmem:[#allocation8 + $0x3c8] sm:$0xff]
    %v414 = vld [vmem:[#allocation8 + $0x3d0] sm:$0xff]
    %v415 = vld [vmem:[#allocation8 + $0x3d8] sm:$0xff]
    %v416 = vld [vmem:[#allocation8 + $0x3e0] sm:$0xff]
    %v417 = vld [vmem:[#allocation8 + $0x3e8] sm:$0xff]
    %v418 = vld [vmem:[#allocation8 + $0x3f0] sm:$0xff]
    %v419 = vld [vmem:[#allocation8 + $0x3f8] sm:$0xff]
    %v420 = vld [vmem:[#allocation8 + $0x400] sm:$0xff]
    %v421 = vld [vmem:[#allocation8 + $0x408] sm:$0xff]
    %v422 = vld [vmem:[#allocation8 + $0x410] sm:$0xff]
    %v423 = vld [vmem:[#allocation8 + $0x418] sm:$0xff]
    %v424 = vld [vmem:[#allocation8 + $0x420] sm:$0xff]
    %v425 = vld [vmem:[#allocation8 + $0x428] sm:$0xff]
    %v426 = vld [vmem:[#allocation8 + $0x430] sm:$0xff]
    %v427 = vld [vmem:[#allocation8 + $0x438] sm:$0xff]
    %v428 = vld [vmem:[#allocation8 + $0x440] sm:$0xff]
    %v429 = vld [vmem:[#allocation8 + $0x448] sm:$0xff]
    %v430 = vld [vmem:[#allocation8 + $0x450] sm:$0xff]
    %v431 = vld [vmem:[#allocation8 + $0x458] sm:$0xff]
    %v432 = vld [vmem:[#allocation8 + $0x460] sm:$0xff]
    %v433 = vld [vmem:[#allocation8 + $0x468] sm:$0xff]
    %v434 = vld [vmem:[#allocation8 + $0x470] sm:$0xff]
    %v435 = vld [vmem:[#allocation8 + $0x478] sm:$0xff]
    %v436 = vld [vmem:[#allocation8 + $0x480] sm:$0xff]
    %v437 = vld [vmem:[#allocation8 + $0x488] sm:$0xff]
    %v438 = vld [vmem:[#allocation8 + $0x490] sm:$0xff]
    %v439 = vld [vmem:[#allocation8 + $0x498] sm:$0xff]
    %v440 = vld [vmem:[#allocation8 + $0x4a0] sm:$0xff]
    %v441 = vld [vmem:[#allocation8 + $0x4a8] sm:$0xff]
    %v442 = vld [vmem:[#allocation8 + $0x4b0] sm:$0xff]
    %v443 = vld [vmem:[#allocation8 + $0x4b8] sm:$0xff]
    %v444 = vld [vmem:[#allocation8 + $0x4c0] sm:$0xff]
    %v445 = vld [vmem:[#allocation8 + $0x4c8] sm:$0xff]
    %v446 = vld [vmem:[#allocation8 + $0x4d0] sm:$0xff]
    %v447 = vld [vmem:[#allocation8 + $0x4d8] sm:$0xff]
    %v448 = vld [vmem:[#allocation8 + $0x4e0] sm:$0xff]
    %v449 = vld [vmem:[#allocation8 + $0x4e8] sm:$0xff]
    %v450 = vld [vmem:[#allocation8 + $0x4f0] sm:$0xff]
    %v451 = vld [vmem:[#allocation8 + $0x4f8] sm:$0xff]
    %v452 = vld [vmem:[#allocation8 + $0x500] sm:$0xff]
    %v453 = vld [vmem:[#allocation8 + $0x508] sm:$0xff]
    %v454 = vld [vmem:[#allocation8 + $0x510] sm:$0xff]
    %v455 = vld [vmem:[#allocation8 + $0x518] sm:$0xff]
    %v456 = vld [vmem:[#allocation8 + $0x520] sm:$0xff]
    %v457 = vld [vmem:[#allocation8 + $0x528] sm:$0xff]
    %v458 = vld [vmem:[#allocation8 + $0x530] sm:$0xff]
    %v459 = vld [vmem:[#allocation8 + $0x538] sm:$0xff]
    %v460 = vld [vmem:[#allocation8 + $0x540] sm:$0xff]
    %v461 = vld [vmem:[#allocation8 + $0x548] sm:$0xff]
    %v462 = vld [vmem:[#allocation8 + $0x550] sm:$0xff]
    %v463 = vld [vmem:[#allocation8 + $0x558] sm:$0xff]
    %v464 = vld [vmem:[#allocation8 + $0x560] sm:$0xff]
    %v465 = vld [vmem:[#allocation8 + $0x568] sm:$0xff]
    %v466 = vld [vmem:[#allocation8 + $0x570] sm:$0xff]
    %v467 = vld [vmem:[#allocation8 + $0x578] sm:$0xff]
    %v468 = vld [vmem:[#allocation8 + $0x580] sm:$0xff]
    %v469 = vld [vmem:[#allocation8 + $0x588] sm:$0xff]
    %v470 = vld [vmem:[#allocation8 + $0x590] sm:$0xff]
    %v471 = vld [vmem:[#allocation8 + $0x598] sm:$0xff]
    %v472 = vld [vmem:[#allocation8 + $0x5a0] sm:$0xff]
    %v473 = vld [vmem:[#allocation8 + $0x5a8] sm:$0xff]
    %v474 = vld [vmem:[#allocation8 + $0x5b0] sm:$0xff]
    %v475 = vld [vmem:[#allocation8 + $0x5b8] sm:$0xff]
    %v476 = vld [vmem:[#allocation8 + $0x5c0] sm:$0xff]
    %v477 = vld [vmem:[#allocation8 + $0x5c8] sm:$0xff]
    %v478 = vld [vmem:[#allocation8 + $0x5d0] sm:$0xff]
    %v479 = vld [vmem:[#allocation8 + $0x5d8] sm:$0xff]
    %v480 = vld [vmem:[#allocation8 + $0x5e0] sm:$0xff]
    %v481 = vld [vmem:[#allocation8 + $0x5e8] sm:$0xff]
    %v482 = vld [vmem:[#allocation8 + $0x5f0] sm:$0xff]
    %v483 = vld [vmem:[#allocation8 + $0x5f8] sm:$0xff]
    %v484 = vld [vmem:[#allocation8 + $0x600] sm:$0xff]
    %v485 = vld [vmem:[#allocation8 + $0x608] sm:$0xff]
    %v486 = vld [vmem:[#allocation8 + $0x610] sm:$0xff]
    %v487 = vld [vmem:[#allocation8 + $0x618] sm:$0xff]
    %v488 = vld [vmem:[#allocation8 + $0x620] sm:$0xff]
    %v489 = vld [vmem:[#allocation8 + $0x628] sm:$0xff]
    %v490 = vld [vmem:[#allocation8 + $0x630] sm:$0xff]
    %v491 = vld [vmem:[#allocation8 + $0x638] sm:$0xff]
    %v492 = vld [vmem:[#allocation8 + $0x640] sm:$0xff]
    %v493 = vld [vmem:[#allocation8 + $0x648] sm:$0xff]
    %v494 = vld [vmem:[#allocation8 + $0x650] sm:$0xff]
    %v495 = vld [vmem:[#allocation8 + $0x658] sm:$0xff]
    %v496 = vld [vmem:[#allocation8 + $0x660] sm:$0xff]
    %v497 = vld [vmem:[#allocation8 + $0x668] sm:$0xff]
    %v498 = vld [vmem:[#allocation8 + $0x670] sm:$0xff]
    %v499 = vld [vmem:[#allocation8 + $0x678] sm:$0xff]
    %v500 = vld [vmem:[#allocation8 + $0x680] sm:$0xff]
    %v501 = vld [vmem:[#allocation8 + $0x688] sm:$0xff]
    %v502 = vld [vmem:[#allocation8 + $0x690] sm:$0xff]
    %v503 = vld [vmem:[#allocation8 + $0x698] sm:$0xff]
    %v504 = vld [vmem:[#allocation8 + $0x6a0] sm:$0xff]
    %v505 = vld [vmem:[#allocation8 + $0x6a8] sm:$0xff]
    %v506 = vld [vmem:[#allocation8 + $0x6b0] sm:$0xff]
    %v507 = vld [vmem:[#allocation8 + $0x6b8] sm:$0xff]
    %v508 = vld [vmem:[#allocation8 + $0x6c0] sm:$0xff]
    %v509 = vld [vmem:[#allocation8 + $0x6c8] sm:$0xff]
    %v510 = vld [vmem:[#allocation8 + $0x6d0] sm:$0xff]
    %v511 = vld [vmem:[#allocation8 + $0x6d8] sm:$0xff]
    %v512 = vld [vmem:[#allocation8 + $0x6e0] sm:$0xff]
    %v513 = vld [vmem:[#allocation8 + $0x6e8] sm:$0xff]
    %v514 = vld [vmem:[#allocation8 + $0x6f0] sm:$0xff]
    %v515 = vld [vmem:[#allocation8 + $0x6f8] sm:$0xff]
    %v516 = vld [vmem:[#allocation8 + $0x700] sm:$0xff]
    %v517 = vld [vmem:[#allocation8 + $0x708] sm:$0xff]
    %v518 = vld [vmem:[#allocation8 + $0x710] sm:$0xff]
    %v519 = vld [vmem:[#allocation8 + $0x718] sm:$0xff]
    %v520 = vld [vmem:[#allocation8 + $0x720] sm:$0xff]
    %v521 = vld [vmem:[#allocation8 + $0x728] sm:$0xff]
    %v522 = vld [vmem:[#allocation8 + $0x730] sm:$0xff]
    %v523 = vld [vmem:[#allocation8 + $0x738] sm:$0xff]
    %v524 = vld [vmem:[#allocation8 + $0x740] sm:$0xff]
    %v525 = vld [vmem:[#allocation8 + $0x748] sm:$0xff]
    %v526 = vld [vmem:[#allocation8 + $0x750] sm:$0xff]
    %v527 = vld [vmem:[#allocation8 + $0x758] sm:$0xff]
    %v528 = vld [vmem:[#allocation8 + $0x760] sm:$0xff]
    %v529 = vld [vmem:[#allocation8 + $0x768] sm:$0xff]
    %v530 = vld [vmem:[#allocation8 + $0x770] sm:$0xff]
    %v531 = vld [vmem:[#allocation8 + $0x778] sm:$0xff]
    %v532 = vld [vmem:[#allocation8 + $0x780] sm:$0xff]
    %v533 = vld [vmem:[#allocation8 + $0x788] sm:$0xff]
    %v534 = vld [vmem:[#allocation8 + $0x790] sm:$0xff]
    %v535 = vld [vmem:[#allocation8 + $0x798] sm:$0xff]
    %v536 = vld [vmem:[#allocation8 + $0x7a0] sm:$0xff]
    %v537 = vld [vmem:[#allocation8 + $0x7a8] sm:$0xff]
    %v538 = vld [vmem:[#allocation8 + $0x7b0] sm:$0xff]
    %v539 = vld [vmem:[#allocation8 + $0x7b8] sm:$0xff]
    %v540 = vld [vmem:[#allocation8 + $0x7c0] sm:$0xff]
    %v541 = vld [vmem:[#allocation8 + $0x7c8] sm:$0xff]
    %v542 = vld [vmem:[#allocation8 + $0x7d0] sm:$0xff]
    %v543 = vld [vmem:[#allocation8 + $0x7d8] sm:$0xff]
    %v544 = vld [vmem:[#allocation8 + $0x7e0] sm:$0xff]
    %v545 = vld [vmem:[#allocation8 + $0x7e8] sm:$0xff]
    %v546 = vld [vmem:[#allocation8 + $0x7f0] sm:$0xff]
    %v547 = vld [vmem:[#allocation8 + $0x7f8] sm:$0xff]
    %v548 = vld [vmem:[#allocation8 + $0x800] sm:$0xff]
    %v549 = vld [vmem:[#allocation8 + $0x808] sm:$0xff]
    %v550 = vld [vmem:[#allocation8 + $0x810] sm:$0xff]
    %v551 = vld [vmem:[#allocation8 + $0x818] sm:$0xff]
    %v552 = vld [vmem:[#allocation8 + $0x820] sm:$0xff]
    %v553 = vld [vmem:[#allocation8 + $0x828] sm:$0xff]
    %v554 = vld [vmem:[#allocation8 + $0x830] sm:$0xff]
    %v555 = vld [vmem:[#allocation8 + $0x838] sm:$0xff]
    %v556 = vld [vmem:[#allocation8 + $0x840] sm:$0xff]
    %v557 = vld [vmem:[#allocation8 + $0x848] sm:$0xff]
    %v558 = vld [vmem:[#allocation8 + $0x850] sm:$0xff]
    %v559 = vld [vmem:[#allocation8 + $0x858] sm:$0xff]
    %v560 = vld [vmem:[#allocation8 + $0x860] sm:$0xff]
    %v561 = vld [vmem:[#allocation8 + $0x868] sm:$0xff]
    %v562 = vld [vmem:[#allocation8 + $0x870] sm:$0xff]
    %v563 = vld [vmem:[#allocation8 + $0x878] sm:$0xff]
    %v564 = vld [vmem:[#allocation8 + $0x880] sm:$0xff]
    %v565 = vld [vmem:[#allocation8 + $0x888] sm:$0xff]
    %v566 = vld [vmem:[#allocation8 + $0x890] sm:$0xff]
    %v567 = vld [vmem:[#allocation8 + $0x898] sm:$0xff]
    %v568 = vld [vmem:[#allocation8 + $0x8a0] sm:$0xff]
    %v569 = vld [vmem:[#allocation8 + $0x8a8] sm:$0xff]
    %v570 = vld [vmem:[#allocation8 + $0x8b0] sm:$0xff]
    %v571 = vld [vmem:[#allocation8 + $0x8b8] sm:$0xff]
    %v572 = vld [vmem:[#allocation8 + $0x8c0] sm:$0xff]
    %v573 = vld [vmem:[#allocation8 + $0x8c8] sm:$0xff]
    %v574 = vld [vmem:[#allocation8 + $0x8d0] sm:$0xff]
    %v575 = vld [vmem:[#allocation8 + $0x8d8] sm:$0xff]
    %v576 = vld [vmem:[#allocation8 + $0x8e0] sm:$0xff]
    %v577 = vld [vmem:[#allocation8 + $0x8e8] sm:$0xff]
    %v578 = vld [vmem:[#allocation8 + $0x8f0] sm:$0xff]
    %v579 = vld [vmem:[#allocation8 + $0x8f8] sm:$0xff]
    %v580 = vld [vmem:[#allocation8 + $0x900] sm:$0xff]
    %v581 = vld [vmem:[#allocation8 + $0x908] sm:$0xff]
    %v582 = vld [vmem:[#allocation8 + $0x910] sm:$0xff]
    %v583 = vld [vmem:[#allocation8 + $0x918] sm:$0xff]
    %v584 = vld [vmem:[#allocation8 + $0x920] sm:$0xff]
    %v585 = vld [vmem:[#allocation8 + $0x928] sm:$0xff]
    %v586 = vld [vmem:[#allocation8 + $0x930] sm:$0xff]
    %v587 = vld [vmem:[#allocation8 + $0x938] sm:$0xff]
    %v588 = vld [vmem:[#allocation8 + $0x940] sm:$0xff]
    %v589 = vld [vmem:[#allocation8 + $0x948] sm:$0xff]
    %v590 = vld [vmem:[#allocation8 + $0x950] sm:$0xff]
    %v591 = vld [vmem:[#allocation8 + $0x958] sm:$0xff]
    %v592 = vld [vmem:[#allocation8 + $0x960] sm:$0xff]
    %v593 = vld [vmem:[#allocation8 + $0x968] sm:$0xff]
    %v594 = vld [vmem:[#allocation8 + $0x970] sm:$0xff]
    %v595 = vld [vmem:[#allocation8 + $0x978] sm:$0xff]
    %v596 = vld [vmem:[#allocation8 + $0x980] sm:$0xff]
    %v597 = vld [vmem:[#allocation8 + $0x988] sm:$0xff]
    %v598 = vld [vmem:[#allocation8 + $0x990] sm:$0xff]
    %v599 = vld [vmem:[#allocation8 + $0x998] sm:$0xff]
    %v600 = vld [vmem:[#allocation8 + $0x9a0] sm:$0xff]
    %v601 = vld [vmem:[#allocation8 + $0x9a8] sm:$0xff]
    %v602 = vld [vmem:[#allocation8 + $0x9b0] sm:$0xff]
    %v603 = vld [vmem:[#allocation8 + $0x9b8] sm:$0xff]
    %v604 = vld [vmem:[#allocation8 + $0x9c0] sm:$0xff]
    %v605 = vld [vmem:[#allocation8 + $0x9c8] sm:$0xff]
    %v606 = vld [vmem:[#allocation8 + $0x9d0] sm:$0xff]
    %v607 = vld [vmem:[#allocation8 + $0x9d8] sm:$0xff]
    %v608 = vld [vmem:[#allocation8 + $0x9e0] sm:$0xff]
    %v609 = vld [vmem:[#allocation8 + $0x9e8] sm:$0xff]
    %v610 = vld [vmem:[#allocation8 + $0x9f0] sm:$0xff]
    %v611 = vld [vmem:[#allocation8 + $0x9f8] sm:$0xff]
    %v612 = vld [vmem:[#allocation8 + $0xa00] sm:$0xff]
    %v613 = vld [vmem:[#allocation8 + $0xa08] sm:$0xff]
    %v614 = vld [vmem:[#allocation8 + $0xa10] sm:$0xff]
    %v615 = vld [vmem:[#allocation8 + $0xa18] sm:$0xff]
    %v616 = vld [vmem:[#allocation8 + $0xa20] sm:$0xff]
    %v617 = vld [vmem:[#allocation8 + $0xa28] sm:$0xff]
    %v618 = vld [vmem:[#allocation8 + $0xa30] sm:$0xff]
    %v619 = vld [vmem:[#allocation8 + $0xa38] sm:$0xff]
    %v620 = vld [vmem:[#allocation8 + $0xa40] sm:$0xff]
    %v621 = vld [vmem:[#allocation8 + $0xa48] sm:$0xff]
    %v623 = vsel %vm170, %v287, 0
    %v626 = vsel %vm170, %v290, 0
    %628 = vmatpush.msra.mxu0 %v367
    %629 = vmatpush.msra.mxu0 %v362
    %630 = vmatpush.msra.mxu0 %v357
    %631 = vmatpush.msra.mxu0 %v352
    %632 = vmatpush.msra.mxu0 %v347
    %633 = vmatpush.msra.mxu0 %v342
    %634 = vmatpush.msra.mxu0 %v337
    %635 = vmatpush.msra.mxu0 %v332
    %636 = vmatpush.msra.mxu0 %v327
    %637 = vmatpush.msra.mxu0 %v322
    %638 = vmatpush.msra.mxu0 %v317
    %639 = vmatpush.msra.mxu0 %v312
    %640 = vmatpush.msra.mxu0 %v307
    %641 = vmatpush.msra.mxu0 %v302
    %642 = vmatpush.msra.mxu0 %v297
    %643 = vmatpush.msra.mxu0 %v292
    %644 = vmatmul.f32.gmra.mxu0 %v195
    %v645 = vpop.f32.mrf.mxu0
    %v646 = vadd.f32 0.0, %v645
    %647 = vmatmul.f32.gmra.mxu0 %v198
    %v648 = vpop.f32.mrf.mxu0
    %v649 = vadd.f32 0.0, %v648
    %650 = vdwg.mxu0
    %651 = vmatpush.msra.mxu0 %v447
    %652 = vmatpush.msra.mxu0 %v442
    %653 = vmatpush.msra.mxu0 %v437
    %654 = vmatpush.msra.mxu0 %v432
    %655 = vmatpush.msra.mxu0 %v427
    %656 = vmatpush.msra.mxu0 %v422
    %657 = vmatpush.msra.mxu0 %v417
    %658 = vmatpush.msra.mxu0 %v412
    %659 = vmatpush.msra.mxu0 %v407
    %660 = vmatpush.msra.mxu0 %v402
    %661 = vmatpush.msra.mxu0 %v397
    %662 = vmatpush.msra.mxu0 %v392
    %663 = vmatpush.msra.mxu0 %v387
    %664 = vmatpush.msra.mxu0 %v382
    %665 = vmatpush.msra.mxu0 %v377
    %666 = vmatpush.msra.mxu0 %v372
    %667 = vmatmul.f32.gmra.mxu0 %v218
    %v668 = vpop.f32.mrf.mxu0
    %v669 = vadd.f32 %v646, %v668
    %670 = vmatmul.f32.gmra.mxu0 %v221
    %v671 = vpop.f32.mrf.mxu0
    %v672 = vadd.f32 %v649, %v671
    %673 = vdwg.mxu0
    %674 = vmatpush.msra.mxu0 %v527
    %675 = vmatpush.msra.mxu0 %v522
    %676 = vmatpush.msra.mxu0 %v517
    %677 = vmatpush.msra.mxu0 %v512
    %678 = vmatpush.msra.mxu0 %v507
    %679 = vmatpush.msra.mxu0 %v502
    %680 = vmatpush.msra.mxu0 %v497
    %681 = vmatpush.msra.mxu0 %v492
    %682 = vmatpush.msra.mxu0 %v487
    %683 = vmatpush.msra.mxu0 %v482
    %684 = vmatpush.msra.mxu0 %v477
    %685 = vmatpush.msra.mxu0 %v472
    %686 = vmatpush.msra.mxu0 %v467
    %687 = vmatpush.msra.mxu0 %v462
    %688 = vmatpush.msra.mxu0 %v457
    %689 = vmatpush.msra.mxu0 %v452
    %690 = vmatmul.f32.gmra.mxu0 %v241
    %v691 = vpop.f32.mrf.mxu0
    %v692 = vadd.f32 %v669, %v691
    %693 = vmatmul.f32.gmra.mxu0 %v244
    %v694 = vpop.f32.mrf.mxu0
    %v695 = vadd.f32 %v672, %v694
    %696 = vdwg.mxu0
    %697 = vmatpush.msra.mxu0 %v607
    %698 = vmatpush.msra.mxu0 %v602
    %699 = vmatpush.msra.mxu0 %v597
    %700 = vmatpush.msra.mxu0 %v592
    %701 = vmatpush.msra.mxu0 %v587
    %702 = vmatpush.msra.mxu0 %v582
    %703 = vmatpush.msra.mxu0 %v577
    %704 = vmatpush.msra.mxu0 %v572
    %705 = vmatpush.msra.mxu0 %v567
    %706 = vmatpush.msra.mxu0 %v562
    %707 = vmatpush.msra.mxu0 %v557
    %708 = vmatpush.msra.mxu0 %v552
    %709 = vmatpush.msra.mxu0 %v547
    %710 = vmatpush.msra.mxu0 %v542
    %711 = vmatpush.msra.mxu0 %v537
    %712 = vmatpush.msra.mxu0 %v532
    %713 = vmatmul.f32.gmra.mxu0 %v264
    %v714 = vpop.f32.mrf.mxu0
    %v715 = vadd.f32 %v692, %v714
    %716 = vmatmul.f32.gmra.mxu0 %v267
    %v717 = vpop.f32.mrf.mxu0
    %v718 = vadd.f32 %v695, %v717
    %719 = vdwg.mxu0
    %720 = vmatpush.msra.mxu0 0.0
    %721 = vmatpush.msra.mxu0 0.0
    %722 = vmatpush.msra.mxu0 0.0
    %723 = vmatpush.msra.mxu0 0.0
    %724 = vmatpush.msra.mxu0 0.0
    %725 = vmatpush.msra.mxu0 0.0
    %726 = vmatpush.msra.mxu0 0.0
    %727 = vmatpush.msra.mxu0 0.0
    %728 = vmatpush.msra.mxu0 0.0
    %729 = vmatpush.msra.mxu0 0.0
    %730 = vmatpush.msra.mxu0 0.0
    %731 = vmatpush.msra.mxu0 0.0
    %732 = vmatpush.msra.mxu0 0.0
    %733 = vmatpush.msra.mxu0 0.0
    %734 = vmatpush.msra.mxu0 %v617
    %735 = vmatpush.msra.mxu0 %v612
    %736 = vmatmul.f32.gmra.mxu0 %v623
    %v737 = vpop.f32.mrf.mxu0
    %v738 = vadd.f32 %v715, %v737
    %739 = vmatmul.f32.gmra.mxu0 %v626
    %v740 = vpop.f32.mrf.mxu0
    %v741 = vadd.f32 %v718, %v740
    %742 = vdwg.mxu0
    %743 = vmatpush.msra.mxu0 %v368
    %744 = vmatpush.msra.mxu0 %v363
    %745 = vmatpush.msra.mxu0 %v358
    %746 = vmatpush.msra.mxu0 %v353
    %747 = vmatpush.msra.mxu0 %v348
    %748 = vmatpush.msra.mxu0 %v343
    %749 = vmatpush.msra.mxu0 %v338
    %750 = vmatpush.msra.mxu0 %v333
    %751 = vmatpush.msra.mxu0 %v328
    %752 = vmatpush.msra.mxu0 %v323
    %753 = vmatpush.msra.mxu0 %v318
    %754 = vmatpush.msra.mxu0 %v313
    %755 = vmatpush.msra.mxu0 %v308
    %756 = vmatpush.msra.mxu0 %v303
    %757 = vmatpush.msra.mxu0 %v298
    %758 = vmatpush.msra.mxu0 %v293
    %759 = vmatmul.f32.gmra.mxu0 %v195
    %v760 = vpop.f32.mrf.mxu0
    %v761 = vadd.f32 0.0, %v760
    %762 = vmatmul.f32.gmra.mxu0 %v198
    %v763 = vpop.f32.mrf.mxu0
    %v764 = vadd.f32 0.0, %v763
    %765 = vdwg.mxu0
    %766 = vmatpush.msra.mxu0 %v448
    %767 = vmatpush.msra.mxu0 %v443
    %768 = vmatpush.msra.mxu0 %v438
    %769 = vmatpush.msra.mxu0 %v433
    %770 = vmatpush.msra.mxu0 %v428
    %771 = vmatpush.msra.mxu0 %v423
    %772 = vmatpush.msra.mxu0 %v418
    %773 = vmatpush.msra.mxu0 %v413
    %774 = vmatpush.msra.mxu0 %v408
    %775 = vmatpush.msra.mxu0 %v403
    %776 = vmatpush.msra.mxu0 %v398
    %777 = vmatpush.msra.mxu0 %v393
    %778 = vmatpush.msra.mxu0 %v388
    %779 = vmatpush.msra.mxu0 %v383
    %780 = vmatpush.msra.mxu0 %v378
    %781 = vmatpush.msra.mxu0 %v373
    %782 = vmatmul.f32.gmra.mxu0 %v218
    %v783 = vpop.f32.mrf.mxu0
    %v784 = vadd.f32 %v761, %v783
    %785 = vmatmul.f32.gmra.mxu0 %v221
    %v786 = vpop.f32.mrf.mxu0
    %v787 = vadd.f32 %v764, %v786
    %788 = vdwg.mxu0
    %789 = vmatpush.msra.mxu0 %v528
    %790 = vmatpush.msra.mxu0 %v523
    %791 = vmatpush.msra.mxu0 %v518
    %792 = vmatpush.msra.mxu0 %v513
    %793 = vmatpush.msra.mxu0 %v508
    %794 = vmatpush.msra.mxu0 %v503
    %795 = vmatpush.msra.mxu0 %v498
    %796 = vmatpush.msra.mxu0 %v493
    %797 = vmatpush.msra.mxu0 %v488
    %798 = vmatpush.msra.mxu0 %v483
    %799 = vmatpush.msra.mxu0 %v478
    %800 = vmatpush.msra.mxu0 %v473
    %801 = vmatpush.msra.mxu0 %v468
    %802 = vmatpush.msra.mxu0 %v463
    %803 = vmatpush.msra.mxu0 %v458
    %804 = vmatpush.msra.mxu0 %v453
    %805 = vmatmul.f32.gmra.mxu0 %v241
    %v806 = vpop.f32.mrf.mxu0
    %v807 = vadd.f32 %v784, %v806
    %808 = vmatmul.f32.gmra.mxu0 %v244
    %v809 = vpop.f32.mrf.mxu0
    %v810 = vadd.f32 %v787, %v809
    %811 = vdwg.mxu0
    %812 = vmatpush.msra.mxu0 %v608
    %813 = vmatpush.msra.mxu0 %v603
    %814 = vmatpush.msra.mxu0 %v598
    %815 = vmatpush.msra.mxu0 %v593
    %816 = vmatpush.msra.mxu0 %v588
    %817 = vmatpush.msra.mxu0 %v583
    %818 = vmatpush.msra.mxu0 %v578
    %819 = vmatpush.msra.mxu0 %v573
    %820 = vmatpush.msra.mxu0 %v568
    %821 = vmatpush.msra.mxu0 %v563
    %822 = vmatpush.msra.mxu0 %v558
    %823 = vmatpush.msra.mxu0 %v553
    %824 = vmatpush.msra.mxu0 %v548
    %825 = vmatpush.msra.mxu0 %v543
    %826 = vmatpush.msra.mxu0 %v538
    %827 = vmatpush.msra.mxu0 %v533
    %828 = vmatmul.f32.gmra.mxu0 %v264
    %v829 = vpop.f32.mrf.mxu0
    %v830 = vadd.f32 %v807, %v829
    %831 = vmatmul.f32.gmra.mxu0 %v267
    %v832 = vpop.f32.mrf.mxu0
    %v833 = vadd.f32 %v810, %v832
    %834 = vdwg.mxu0
    %835 = vmatpush.msra.mxu0 0.0
    %836 = vmatpush.msra.mxu0 0.0
    %837 = vmatpush.msra.mxu0 0.0
    %838 = vmatpush.msra.mxu0 0.0
    %839 = vmatpush.msra.mxu0 0.0
    %840 = vmatpush.msra.mxu0 0.0
    %841 = vmatpush.msra.mxu0 0.0
    %842 = vmatpush.msra.mxu0 0.0
    %843 = vmatpush.msra.mxu0 0.0
    %844 = vmatpush.msra.mxu0 0.0
    %845 = vmatpush.msra.mxu0 0.0
    %846 = vmatpush.msra.mxu0 0.0
    %847 = vmatpush.msra.mxu0 0.0
    %848 = vmatpush.msra.mxu0 0.0
    %849 = vmatpush.msra.mxu0 %v618
    %850 = vmatpush.msra.mxu0 %v613
    %851 = vmatmul.f32.gmra.mxu0 %v623
    %v852 = vpop.f32.mrf.mxu0
    %v853 = vadd.f32 %v830, %v852
    %854 = vmatmul.f32.gmra.mxu0 %v626
    %v855 = vpop.f32.mrf.mxu0
    %v856 = vadd.f32 %v833, %v855
    %857 = vdwg.mxu0
    %858 = vmatpush.msra.mxu0 %v369
    %859 = vmatpush.msra.mxu0 %v364
    %860 = vmatpush.msra.mxu0 %v359
    %861 = vmatpush.msra.mxu0 %v354
    %862 = vmatpush.msra.mxu0 %v349
    %863 = vmatpush.msra.mxu0 %v344
    %864 = vmatpush.msra.mxu0 %v339
    %865 = vmatpush.msra.mxu0 %v334
    %866 = vmatpush.msra.mxu0 %v329
    %867 = vmatpush.msra.mxu0 %v324
    %868 = vmatpush.msra.mxu0 %v319
    %869 = vmatpush.msra.mxu0 %v314
    %870 = vmatpush.msra.mxu0 %v309
    %871 = vmatpush.msra.mxu0 %v304
    %872 = vmatpush.msra.mxu0 %v299
    %873 = vmatpush.msra.mxu0 %v294
    %874 = vmatmul.f32.gmra.mxu0 %v195
    %v875 = vpop.f32.mrf.mxu0
    %v876 = vadd.f32 0.0, %v875
    %877 = vmatmul.f32.gmra.mxu0 %v198
    %v878 = vpop.f32.mrf.mxu0
    %v879 = vadd.f32 0.0, %v878
    %880 = vdwg.mxu0
    %881 = vmatpush.msra.mxu0 %v449
    %882 = vmatpush.msra.mxu0 %v444
    %883 = vmatpush.msra.mxu0 %v439
    %884 = vmatpush.msra.mxu0 %v434
    %885 = vmatpush.msra.mxu0 %v429
    %886 = vmatpush.msra.mxu0 %v424
    %887 = vmatpush.msra.mxu0 %v419
    %888 = vmatpush.msra.mxu0 %v414
    %889 = vmatpush.msra.mxu0 %v409
    %890 = vmatpush.msra.mxu0 %v404
    %891 = vmatpush.msra.mxu0 %v399
    %892 = vmatpush.msra.mxu0 %v394
    %893 = vmatpush.msra.mxu0 %v389
    %894 = vmatpush.msra.mxu0 %v384
    %895 = vmatpush.msra.mxu0 %v379
    %896 = vmatpush.msra.mxu0 %v374
    %897 = vmatmul.f32.gmra.mxu0 %v218
    %v898 = vpop.f32.mrf.mxu0
    %v899 = vadd.f32 %v876, %v898
    %900 = vmatmul.f32.gmra.mxu0 %v221
    %v901 = vpop.f32.mrf.mxu0
    %v902 = vadd.f32 %v879, %v901
    %903 = vdwg.mxu0
    %904 = vmatpush.msra.mxu0 %v529
    %905 = vmatpush.msra.mxu0 %v524
    %906 = vmatpush.msra.mxu0 %v519
    %907 = vmatpush.msra.mxu0 %v514
    %908 = vmatpush.msra.mxu0 %v509
    %909 = vmatpush.msra.mxu0 %v504
    %910 = vmatpush.msra.mxu0 %v499
    %911 = vmatpush.msra.mxu0 %v494
    %912 = vmatpush.msra.mxu0 %v489
    %913 = vmatpush.msra.mxu0 %v484
    %914 = vmatpush.msra.mxu0 %v479
    %915 = vmatpush.msra.mxu0 %v474
    %916 = vmatpush.msra.mxu0 %v469
    %917 = vmatpush.msra.mxu0 %v464
    %918 = vmatpush.msra.mxu0 %v459
    %919 = vmatpush.msra.mxu0 %v454
    %920 = vmatmul.f32.gmra.mxu0 %v241
    %v921 = vpop.f32.mrf.mxu0
    %v922 = vadd.f32 %v899, %v921
    %923 = vmatmul.f32.gmra.mxu0 %v244
    %v924 = vpop.f32.mrf.mxu0
    %v925 = vadd.f32 %v902, %v924
    %926 = vdwg.mxu0
    %927 = vmatpush.msra.mxu0 %v609
    %928 = vmatpush.msra.mxu0 %v604
    %929 = vmatpush.msra.mxu0 %v599
    %930 = vmatpush.msra.mxu0 %v594
    %931 = vmatpush.msra.mxu0 %v589
    %932 = vmatpush.msra.mxu0 %v584
    %933 = vmatpush.msra.mxu0 %v579
    %934 = vmatpush.msra.mxu0 %v574
    %935 = vmatpush.msra.mxu0 %v569
    %936 = vmatpush.msra.mxu0 %v564
    %937 = vmatpush.msra.mxu0 %v559
    %938 = vmatpush.msra.mxu0 %v554
    %939 = vmatpush.msra.mxu0 %v549
    %940 = vmatpush.msra.mxu0 %v544
    %941 = vmatpush.msra.mxu0 %v539
    %942 = vmatpush.msra.mxu0 %v534
    %943 = vmatmul.f32.gmra.mxu0 %v264
    %v944 = vpop.f32.mrf.mxu0
    %v945 = vadd.f32 %v922, %v944
    %946 = vmatmul.f32.gmra.mxu0 %v267
    %v947 = vpop.f32.mrf.mxu0
    %v948 = vadd.f32 %v925, %v947
    %949 = vdwg.mxu0
    %950 = vmatpush.msra.mxu0 0.0
    %951 = vmatpush.msra.mxu0 0.0
    %952 = vmatpush.msra.mxu0 0.0
    %953 = vmatpush.msra.mxu0 0.0
    %954 = vmatpush.msra.mxu0 0.0
    %955 = vmatpush.msra.mxu0 0.0
    %956 = vmatpush.msra.mxu0 0.0
    %957 = vmatpush.msra.mxu0 0.0
    %958 = vmatpush.msra.mxu0 0.0
    %959 = vmatpush.msra.mxu0 0.0
    %960 = vmatpush.msra.mxu0 0.0
    %961 = vmatpush.msra.mxu0 0.0
    %962 = vmatpush.msra.mxu0 0.0
    %963 = vmatpush.msra.mxu0 0.0
    %964 = vmatpush.msra.mxu0 %v619
    %965 = vmatpush.msra.mxu0 %v614
    %966 = vmatmul.f32.gmra.mxu0 %v623
    %v967 = vpop.f32.mrf.mxu0
    %v968 = vadd.f32 %v945, %v967
    %969 = vmatmul.f32.gmra.mxu0 %v626
    %v970 = vpop.f32.mrf.mxu0
    %v971 = vadd.f32 %v948, %v970
    %972 = vdwg.mxu0
    %973 = vmatpush.msra.mxu0 %v370
    %974 = vmatpush.msra.mxu0 %v365
    %975 = vmatpush.msra.mxu0 %v360
    %976 = vmatpush.msra.mxu0 %v355
    %977 = vmatpush.msra.mxu0 %v350
    %978 = vmatpush.msra.mxu0 %v345
    %979 = vmatpush.msra.mxu0 %v340
    %980 = vmatpush.msra.mxu0 %v335
    %981 = vmatpush.msra.mxu0 %v330
    %982 = vmatpush.msra.mxu0 %v325
    %983 = vmatpush.msra.mxu0 %v320
    %984 = vmatpush.msra.mxu0 %v315
    %985 = vmatpush.msra.mxu0 %v310
    %986 = vmatpush.msra.mxu0 %v305
    %987 = vmatpush.msra.mxu0 %v300
    %988 = vmatpush.msra.mxu0 %v295
    %989 = vmatmul.f32.gmra.mxu0 %v195
    %v990 = vpop.f32.mrf.mxu0
    %v991 = vadd.f32 0.0, %v990
    %992 = vmatmul.f32.gmra.mxu0 %v198
    %v993 = vpop.f32.mrf.mxu0
    %v994 = vadd.f32 0.0, %v993
    %995 = vdwg.mxu0
    %996 = vmatpush.msra.mxu0 %v450
    %997 = vmatpush.msra.mxu0 %v445
    %998 = vmatpush.msra.mxu0 %v440
    %999 = vmatpush.msra.mxu0 %v435
    %1000 = vmatpush.msra.mxu0 %v430
    %1001 = vmatpush.msra.mxu0 %v425
    %1002 = vmatpush.msra.mxu0 %v420
    %1003 = vmatpush.msra.mxu0 %v415
    %1004 = vmatpush.msra.mxu0 %v410
    %1005 = vmatpush.msra.mxu0 %v405
    %1006 = vmatpush.msra.mxu0 %v400
    %1007 = vmatpush.msra.mxu0 %v395
    %1008 = vmatpush.msra.mxu0 %v390
    %1009 = vmatpush.msra.mxu0 %v385
    %1010 = vmatpush.msra.mxu0 %v380
    %1011 = vmatpush.msra.mxu0 %v375
    %1012 = vmatmul.f32.gmra.mxu0 %v218
    %v1013 = vpop.f32.mrf.mxu0
    %v1014 = vadd.f32 %v991, %v1013
    %1015 = vmatmul.f32.gmra.mxu0 %v221
    %v1016 = vpop.f32.mrf.mxu0
    %v1017 = vadd.f32 %v994, %v1016
    %1018 = vdwg.mxu0
    %1019 = vmatpush.msra.mxu0 %v530
    %1020 = vmatpush.msra.mxu0 %v525
    %1021 = vmatpush.msra.mxu0 %v520
    %1022 = vmatpush.msra.mxu0 %v515
    %1023 = vmatpush.msra.mxu0 %v510
    %1024 = vmatpush.msra.mxu0 %v505
    %1025 = vmatpush.msra.mxu0 %v500
    %1026 = vmatpush.msra.mxu0 %v495
    %1027 = vmatpush.msra.mxu0 %v490
    %1028 = vmatpush.msra.mxu0 %v485
    %1029 = vmatpush.msra.mxu0 %v480
    %1030 = vmatpush.msra.mxu0 %v475
    %1031 = vmatpush.msra.mxu0 %v470
    %1032 = vmatpush.msra.mxu0 %v465
    %1033 = vmatpush.msra.mxu0 %v460
    %1034 = vmatpush.msra.mxu0 %v455
    %1035 = vmatmul.f32.gmra.mxu0 %v241
    %v1036 = vpop.f32.mrf.mxu0
    %v1037 = vadd.f32 %v1014, %v1036
    %1038 = vmatmul.f32.gmra.mxu0 %v244
    %v1039 = vpop.f32.mrf.mxu0
    %v1040 = vadd.f32 %v1017, %v1039
    %1041 = vdwg.mxu0
    %1042 = vmatpush.msra.mxu0 %v610
    %1043 = vmatpush.msra.mxu0 %v605
    %1044 = vmatpush.msra.mxu0 %v600
    %1045 = vmatpush.msra.mxu0 %v595
    %1046 = vmatpush.msra.mxu0 %v590
    %1047 = vmatpush.msra.mxu0 %v585
    %1048 = vmatpush.msra.mxu0 %v580
    %1049 = vmatpush.msra.mxu0 %v575
    %1050 = vmatpush.msra.mxu0 %v570
    %1051 = vmatpush.msra.mxu0 %v565
    %1052 = vmatpush.msra.mxu0 %v560
    %1053 = vmatpush.msra.mxu0 %v555
    %1054 = vmatpush.msra.mxu0 %v550
    %1055 = vmatpush.msra.mxu0 %v545
    %1056 = vmatpush.msra.mxu0 %v540
    %1057 = vmatpush.msra.mxu0 %v535
    %1058 = vmatmul.f32.gmra.mxu0 %v264
    %v1059 = vpop.f32.mrf.mxu0
    %v1060 = vadd.f32 %v1037, %v1059
    %1061 = vmatmul.f32.gmra.mxu0 %v267
    %v1062 = vpop.f32.mrf.mxu0
    %v1063 = vadd.f32 %v1040, %v1062
    %1064 = vdwg.mxu0
    %1065 = vmatpush.msra.mxu0 0.0
    %1066 = vmatpush.msra.mxu0 0.0
    %1067 = vmatpush.msra.mxu0 0.0
    %1068 = vmatpush.msra.mxu0 0.0
    %1069 = vmatpush.msra.mxu0 0.0
    %1070 = vmatpush.msra.mxu0 0.0
    %1071 = vmatpush.msra.mxu0 0.0
    %1072 = vmatpush.msra.mxu0 0.0
    %1073 = vmatpush.msra.mxu0 0.0
    %1074 = vmatpush.msra.mxu0 0.0
    %1075 = vmatpush.msra.mxu0 0.0
    %1076 = vmatpush.msra.mxu0 0.0
    %1077 = vmatpush.msra.mxu0 0.0
    %1078 = vmatpush.msra.mxu0 0.0
    %1079 = vmatpush.msra.mxu0 %v620
    %1080 = vmatpush.msra.mxu0 %v615
    %1081 = vmatmul.f32.gmra.mxu0 %v623
    %v1082 = vpop.f32.mrf.mxu0
    %v1083 = vadd.f32 %v1060, %v1082
    %1084 = vmatmul.f32.gmra.mxu0 %v626
    %v1085 = vpop.f32.mrf.mxu0
    %v1086 = vadd.f32 %v1063, %v1085
    %1087 = vdwg.mxu0
    %1088 = vmatpush.msra.mxu0 %v371
    %1089 = vmatpush.msra.mxu0 %v366
    %1090 = vmatpush.msra.mxu0 %v361
    %1091 = vmatpush.msra.mxu0 %v356
    %1092 = vmatpush.msra.mxu0 %v351
    %1093 = vmatpush.msra.mxu0 %v346
    %1094 = vmatpush.msra.mxu0 %v341
    %1095 = vmatpush.msra.mxu0 %v336
    %1096 = vmatpush.msra.mxu0 %v331
    %1097 = vmatpush.msra.mxu0 %v326
    %1098 = vmatpush.msra.mxu0 %v321
    %1099 = vmatpush.msra.mxu0 %v316
    %1100 = vmatpush.msra.mxu0 %v311
    %1101 = vmatpush.msra.mxu0 %v306
    %1102 = vmatpush.msra.mxu0 %v301
    %1103 = vmatpush.msra.mxu0 %v296
    %1104 = vmatmul.f32.gmra.mxu0 %v195
    %v1105 = vpop.f32.mrf.mxu0
    %v1106 = vadd.f32 0.0, %v1105
    %1107 = vmatmul.f32.gmra.mxu0 %v198
    %v1108 = vpop.f32.mrf.mxu0
    %v1109 = vadd.f32 0.0, %v1108
    %1110 = vdwg.mxu0
    %1111 = vmatpush.msra.mxu0 %v451
    %1112 = vmatpush.msra.mxu0 %v446
    %1113 = vmatpush.msra.mxu0 %v441
    %1114 = vmatpush.msra.mxu0 %v436
    %1115 = vmatpush.msra.mxu0 %v431
    %1116 = vmatpush.msra.mxu0 %v426
    %1117 = vmatpush.msra.mxu0 %v421
    %1118 = vmatpush.msra.mxu0 %v416
    %1119 = vmatpush.msra.mxu0 %v411
    %1120 = vmatpush.msra.mxu0 %v406
    %1121 = vmatpush.msra.mxu0 %v401
    %1122 = vmatpush.msra.mxu0 %v396
    %1123 = vmatpush.msra.mxu0 %v391
    %1124 = vmatpush.msra.mxu0 %v386
    %1125 = vmatpush.msra.mxu0 %v381
    %1126 = vmatpush.msra.mxu0 %v376
    %1127 = vmatmul.f32.gmra.mxu0 %v218
    %v1128 = vpop.f32.mrf.mxu0
    %v1129 = vadd.f32 %v1106, %v1128
    %1130 = vmatmul.f32.gmra.mxu0 %v221
    %v1131 = vpop.f32.mrf.mxu0
    %v1132 = vadd.f32 %v1109, %v1131
    %1133 = vdwg.mxu0
    %1134 = vmatpush.msra.mxu0 %v531
    %1135 = vmatpush.msra.mxu0 %v526
    %1136 = vmatpush.msra.mxu0 %v521
    %1137 = vmatpush.msra.mxu0 %v516
    %1138 = vmatpush.msra.mxu0 %v511
    %1139 = vmatpush.msra.mxu0 %v506
    %1140 = vmatpush.msra.mxu0 %v501
    %1141 = vmatpush.msra.mxu0 %v496
    %1142 = vmatpush.msra.mxu0 %v491
    %1143 = vmatpush.msra.mxu0 %v486
    %1144 = vmatpush.msra.mxu0 %v481
    %1145 = vmatpush.msra.mxu0 %v476
    %1146 = vmatpush.msra.mxu0 %v471
    %1147 = vmatpush.msra.mxu0 %v466
    %1148 = vmatpush.msra.mxu0 %v461
    %1149 = vmatpush.msra.mxu0 %v456
    %1150 = vmatmul.f32.gmra.mxu0 %v241
    %v1151 = vpop.f32.mrf.mxu0
    %v1152 = vadd.f32 %v1129, %v1151
    %1153 = vmatmul.f32.gmra.mxu0 %v244
    %v1154 = vpop.f32.mrf.mxu0
    %v1155 = vadd.f32 %v1132, %v1154
    %1156 = vdwg.mxu0
    %1157 = vmatpush.msra.mxu0 %v611
    %1158 = vmatpush.msra.mxu0 %v606
    %1159 = vmatpush.msra.mxu0 %v601
    %1160 = vmatpush.msra.mxu0 %v596
    %1161 = vmatpush.msra.mxu0 %v591
    %1162 = vmatpush.msra.mxu0 %v586
    %1163 = vmatpush.msra.mxu0 %v581
    %1164 = vmatpush.msra.mxu0 %v576
    %1165 = vmatpush.msra.mxu0 %v571
    %1166 = vmatpush.msra.mxu0 %v566
    %1167 = vmatpush.msra.mxu0 %v561
    %1168 = vmatpush.msra.mxu0 %v556
    %1169 = vmatpush.msra.mxu0 %v551
    %1170 = vmatpush.msra.mxu0 %v546
    %1171 = vmatpush.msra.mxu0 %v541
    %1172 = vmatpush.msra.mxu0 %v536
    %1173 = vmatmul.f32.gmra.mxu0 %v264
    %v1174 = vpop.f32.mrf.mxu0
    %v1175 = vadd.f32 %v1152, %v1174
    %1176 = vmatmul.f32.gmra.mxu0 %v267
    %v1177 = vpop.f32.mrf.mxu0
    %v1178 = vadd.f32 %v1155, %v1177
    %1179 = vdwg.mxu0
    %1180 = vmatpush.msra.mxu0 0.0
    %1181 = vmatpush.msra.mxu0 0.0
    %1182 = vmatpush.msra.mxu0 0.0
    %1183 = vmatpush.msra.mxu0 0.0
    %1184 = vmatpush.msra.mxu0 0.0
    %1185 = vmatpush.msra.mxu0 0.0
    %1186 = vmatpush.msra.mxu0 0.0
    %1187 = vmatpush.msra.mxu0 0.0
    %1188 = vmatpush.msra.mxu0 0.0
    %1189 = vmatpush.msra.mxu0 0.0
    %1190 = vmatpush.msra.mxu0 0.0
    %1191 = vmatpush.msra.mxu0 0.0
    %1192 = vmatpush.msra.mxu0 0.0
    %1193 = vmatpush.msra.mxu0 0.0
    %1194 = vmatpush.msra.mxu0 %v621
    %1195 = vmatpush.msra.mxu0 %v616
    %1196 = vmatmul.f32.gmra.mxu0 %v623
    %v1197 = vpop.f32.mrf.mxu0
    %v1198 = vadd.f32 %v1175, %v1197
    %1199 = vmatmul.f32.gmra.mxu0 %v626
    %v1200 = vpop.f32.mrf.mxu0
    %v1201 = vadd.f32 %v1178, %v1200
    %1202 = vdwg.mxu0
    %v1203 = vmul.f32 %v738, %v738
    %v1204 = vmul.f32 %v741, %v741
    %1207 = vrot.lane.b32.xlu0 %v1203, 48
    %v1208 = vpop.permute.xlu0 %1207
    %1209 = vrot.lane.b32.xlu0 %v1204, 48
    %v1210 = vpop.permute.xlu0 %1209
    %v1213 = vsub.f32 %v738, %v1208
    %v1214 = vsub.f32 %v741, %v1210
    %v1215 = vmul.f32 %v853, %v853
    %v1216 = vmul.f32 %v856, %v856
    %1219 = vrot.lane.b32.xlu0 %v1203, 16
    %v1220 = vpop.permute.xlu0 %1219
    %1221 = vrot.lane.b32.xlu0 %v1215, 16
    %v1222 = vpop.permute.xlu0 %1221
    %1223 = vrot.lane.b32.xlu0 %v1204, 16
    %v1224 = vpop.permute.xlu0 %1223
    %1225 = vrot.lane.b32.xlu0 %v1216, 16
    %v1226 = vpop.permute.xlu0 %1225
    %v1227 = vsel %vm170, %v1220, %v1222
    %v1228 = vsel %vm170, %v1224, %v1226
    %v1233 = vsub.f32 %v853, %v1220
    %v1234 = vsub.f32 %v968, %v1227
    %v1235 = vsub.f32 %v856, %v1224
    %v1236 = vsub.f32 %v971, %v1228
    %1241 = vrot.lane.b32.xlu0 %v738, 32
    %v1242 = vpop.permute.xlu0 %1241
    %1243 = vrot.lane.b32.xlu0 %v853, 32
    %v1244 = vpop.permute.xlu0 %1243
    %1245 = vrot.lane.b32.xlu0 %v741, 32
    %v1246 = vpop.permute.xlu0 %1245
    %1247 = vrot.lane.b32.xlu0 %v856, 32
    %v1248 = vpop.permute.xlu0 %1247
    %vm1249 = vcmask 261120
    %v1250 = vsel %vm1249, %v1242, %v1244
    %v1251 = vsel %vm1249, %v1246, %v1248
    %v1254 = vmul.f32 %v738, %v1250
    %v1255 = vmul.f32 %v741, %v1251
    %v1256 = vsub.f32 %v1083, %v1254
    %v1257 = vsub.f32 %v1086, %v1255
    %v1258 = vmul.f32 %v1256, 2.0
    %v1259 = vmul.f32 %v1257, 2.0
    %v1260 = vadd.f32 %v1258, 0.0009
    %v1261 = vadd.f32 %v1259, 0.0009
    %1266 = vrot.lane.b32.xlu0 %v1233, 64
    %v1267 = vpop.permute.xlu0 %1266
    %1268 = vrot.lane.b32.xlu0 %v1234, 64
    %v1269 = vpop.permute.xlu0 %1268
    %1270 = vrot.lane.b32.xlu0 %v1235, 64
    %v1271 = vpop.permute.xlu0 %1270
    %1272 = vrot.lane.b32.xlu0 %v1236, 64
    %v1273 = vpop.permute.xlu0 %1272
    %vm1274 = vcmask 523264
    %v1275 = vsel %vm1274, %v1267, %v1269
    %v1276 = vsel %vm1274, %v1271, %v1273
    %v1279 = vadd.f32 %v1213, %v1275
    %v1280 = vadd.f32 %v1214, %v1276
    %v1281 = vadd.f32 %v1279, 0.0009
    %v1282 = vadd.f32 %v1280, 0.0009
    %v1283 = vrcp.pop %v1281
    %v1284 = vrcp.pop %v1282
    %v1285 = vmul.f32 %v1281, %v1283
    %v1286 = vmul.f32 %v1282, %v1284
    %v1287 = vsub.f32 2.0, %v1285
    %v1288 = vsub.f32 2.0, %v1286
    %v1289 = vmul.f32 %v1283, %v1287
    %v1290 = vmul.f32 %v1284, %v1288
    %1293 = vrot.lane.b32.xlu0 %v1289, 80
    %v1294 = vpop.permute.xlu0 %1293
    %1295 = vrot.lane.b32.xlu0 %v1290, 80
    %v1296 = vpop.permute.xlu0 %1295
    %v1299 = vmul.f32 %v1260, %v1294
    %v1300 = vmul.f32 %v1261, %v1296
    %v1303 = vsub.f32 %v968, %v1222
    %v1304 = vsub.f32 %v971, %v1226
    %1305 = vrot.lane.b32.xlu0 %v853, 112
    %v1306 = vpop.permute.xlu0 %1305
    %1307 = vrot.lane.b32.xlu0 %v856, 112
    %v1308 = vpop.permute.xlu0 %1307
    %v1311 = vmul.f32 %v738, %v1306
    %v1312 = vmul.f32 %v741, %v1308
    %1315 = vrot.lane.b32.xlu0 %v1311, 48
    %v1316 = vpop.permute.xlu0 %1315
    %1317 = vrot.lane.b32.xlu0 %v1312, 48
    %v1318 = vpop.permute.xlu0 %1317
    %v1321 = vsub.f32 %v1083, %v1316
    %v1322 = vsub.f32 %v1086, %v1318
    %v1323 = vmul.f32 %v1321, 2.0
    %v1324 = vmul.f32 %v1322, 2.0
    %v1325 = vadd.f32 %v1323, 0.0009
    %v1326 = vadd.f32 %v1324, 0.0009
    %1329 = vrot.lane.b32.xlu0 %v1303, 16
    %v1330 = vpop.permute.xlu0 %1329
    %1331 = vrot.lane.b32.xlu0 %v1304, 16
    %v1332 = vpop.permute.xlu0 %1331
    %v1335 = vadd.f32 %v1213, %v1330
    %v1336 = vadd.f32 %v1214, %v1332
    %v1337 = vadd.f32 %v1335, 0.0009
    %v1338 = vadd.f32 %v1336, 0.0009
    %v1339 = vrcp.pop %v1337
    %v1340 = vrcp.pop %v1338
    %v1341 = vmul.f32 %v1337, %v1339
    %v1342 = vmul.f32 %v1338, %v1340
    %v1343 = vsub.f32 2.0, %v1341
    %v1344 = vsub.f32 2.0, %v1342
    %v1345 = vmul.f32 %v1339, %v1343
    %v1346 = vmul.f32 %v1340, %v1344
    %v1347 = vmul.f32 %v1325, %v1345
    %v1348 = vmul.f32 %v1326, %v1346
    %1349 = vrot.lane.b32.xlu0 %v1233, 48
    %v1350 = vpop.permute.xlu0 %1349
    %1351 = vrot.lane.b32.xlu0 %v1234, 48
    %v1352 = vpop.permute.xlu0 %1351
    %1353 = vrot.lane.b32.xlu0 %v1235, 48
    %v1354 = vpop.permute.xlu0 %1353
    %1355 = vrot.lane.b32.xlu0 %v1236, 48
    %v1356 = vpop.permute.xlu0 %1355
    %v1357 = vsel %vm101, %v1350, %v1352
    %v1358 = vsel %vm101, %v1354, %v1356
    %vm1361 = vcmp.gt.f32.partialorder %v1303, %v1357
    %vm1362 = vcmp.gt.f32.partialorder %v1304, %v1358
    %1365 = vrot.lane.b32.xlu0 %v1347, 112
    %v1366 = vpop.permute.xlu0 %1365
    %1367 = vrot.lane.b32.xlu0 %v1348, 112
    %v1368 = vpop.permute.xlu0 %1367
    %1373 = vrot.lane.b32.xlu0 %v1299, 32
    %v1374 = vpop.permute.xlu0 %1373
    %1375 = vrot.lane.b32.xlu0 %v1300, 32
    %v1376 = vpop.permute.xlu0 %1375
    %v1379 = vsel %vm1361, %v1366, %v1374
    %v1380 = vsel %vm1362, %v1368, %v1376
    %v1381 = vsel %vm1361, %v1303, %v1357
    %v1382 = vsel %vm1362, %v1304, %v1358
    %1383 = vrot.lane.b32.xlu0 %v853, 64
    %v1384 = vpop.permute.xlu0 %1383
    %1385 = vrot.lane.b32.xlu0 %v856, 64
    %v1386 = vpop.permute.xlu0 %1385
    %v1389 = vmul.f32 %v738, %v1384
    %v1390 = vmul.f32 %v741, %v1386
    %1393 = vrot.lane.b32.xlu0 %v1389, 96
    %v1394 = vpop.permute.xlu0 %1393
    %1395 = vrot.lane.b32.xlu0 %v1390, 96
    %v1396 = vpop.permute.xlu0 %1395
    %v1399 = vsub.f32 %v1083, %v1394
    %v1400 = vsub.f32 %v1198, %v1394
    %v1401 = vsub.f32 %v1086, %v1396
    %v1402 = vsub.f32 %v1201, %v1396
    %v1403 = vmul.f32 %v1399, 2.0
    %v1404 = vmul.f32 %v1400, 2.0
    %v1405 = vmul.f32 %v1401, 2.0
    %v1406 = vmul.f32 %v1402, 2.0
    %v1407 = vadd.f32 %v1403, 0.0009
    %v1408 = vadd.f32 %v1404, 0.0009
    %v1409 = vadd.f32 %v1405, 0.0009
    %v1410 = vadd.f32 %v1406, 0.0009
    %1411 = vrot.lane.b32.xlu0 %v1303, 96
    %v1412 = vpop.permute.xlu0 %1411
    %1413 = vrot.lane.b32.xlu0 %v1304, 96
    %v1414 = vpop.permute.xlu0 %1413
    %v1417 = vadd.f32 %v1213, %v1412
    %v1418 = vadd.f32 %v1214, %v1414
    %v1419 = vadd.f32 %v1417, 0.0009
    %v1420 = vadd.f32 %v1418, 0.0009
    %v1421 = vrcp.pop %v1419
    %v1422 = vrcp.pop %v1420
    %v1423 = vmul.f32 %v1419, %v1421
    %v1424 = vmul.f32 %v1420, %v1422
    %v1425 = vsub.f32 2.0, %v1423
    %v1426 = vsub.f32 2.0, %v1424
    %v1427 = vmul.f32 %v1421, %v1425
    %v1428 = vmul.f32 %v1422, %v1426
    %1431 = vrot.lane.b32.xlu0 %v1427, 48
    %v1432 = vpop.permute.xlu0 %1431
    %1433 = vrot.lane.b32.xlu0 %v1428, 48
    %v1434 = vpop.permute.xlu0 %1433
    %v1437 = vmul.f32 %v1407, %v1432
    %v1438 = vmul.f32 %v1408, %v1432
    %v1439 = vmul.f32 %v1409, %v1434
    %v1440 = vmul.f32 %v1410, %v1434
    %1443 = vrot.lane.b32.xlu0 %v1381, 48
    %v1444 = vpop.permute.xlu0 %1443
    %1445 = vrot.lane.b32.xlu0 %v1382, 48
    %v1446 = vpop.permute.xlu0 %1445
    %vm1449 = vcmp.gt.f32.partialorder %v1303, %v1444
    %vm1450 = vcmp.gt.f32.partialorder %v1304, %v1446
    %1455 = vrot.lane.b32.xlu0 %v1437, 112
    %v1456 = vpop.permute.xlu0 %1455
    %1457 = vrot.lane.b32.xlu0 %v1438, 112
    %v1458 = vpop.permute.xlu0 %1457
    %1459 = vrot.lane.b32.xlu0 %v1439, 112
    %v1460 = vpop.permute.xlu0 %1459
    %1461 = vrot.lane.b32.xlu0 %v1440, 112
    %v1462 = vpop.permute.xlu0 %1461
    %v1463 = vsel %vm155, %v1456, %v1458
    %v1464 = vsel %vm155, %v1460, %v1462
    %1469 = vrot.lane.b32.xlu0 %v1379, 48
    %v1470 = vpop.permute.xlu0 %1469
    %1471 = vrot.lane.b32.xlu0 %v1380, 48
    %v1472 = vpop.permute.xlu0 %1471
    %v1475 = vsel %vm1449, %v1463, %v1470
    %v1476 = vsel %vm1450, %v1464, %v1472
    %1479 = vrot.lane.b32.xlu0 %v1475, 48
    %v1480 = vpop.permute.xlu0 %1479
    %1481 = vrot.lane.b32.xlu0 %v1476, 48
    %v1482 = vpop.permute.xlu0 %1481
    %v1485 = vsel %vm101, %v1480, 0.0
    %v1486 = vsel %vm101, %v1482, 0.0
    %v1487 = vadd.f32 %v1485, %v1486
    %1488 = vadd.xlane.f32.xlu0 %v1487
    %v1489 = vpop.xlane.xlu0 %1488
    %v1490 = vrot.slane %v1489, 4
    %v1491 = vadd.f32 %v1489, %v1490
    %v1492 = vrot.slane %v1491, 2
    %v1493 = vadd.f32 %v1491, %v1492
    %v1494 = vrot.slane %v1493, 1
    %v1495 = vadd.f32 %v1493, %v1494
    %s1496 = vtos %v1495
    %s1497 = smul.f32 %s1496, 0.0013020834
    %s1498 = scalar_lea.smem [#allocation10], 0
    %1499 = sst [smem:[%s1498]] %s1497
    // Predicated region
    $region34: #{tpu_custom_call.1} parent=1 // pred_check
      _
    $region35: #{tpu_custom_call.1} parent=1 // pred_check_branch
      %1501 = sbr.rel (0) target = $region37
    $region36: #{tpu_custom_call.1} parent=1 // pred_region
      %1503 = vsyncadd [#allocation4], 0
      %s1505 = sshll.u32 %s4, 4
      %s1506 = int_to_ptr.hbm [resolvable:$true] %s1505
      %1508 = dma.smem_to_hbm [#allocation10], 16, %s1506, [#allocation4]
    $region37: #{tpu_custom_call.1} parent=1 // pred_fallthru
      _
    // Predicated region
    $region38: #{tpu_custom_call.1} parent=1 // pred_check
      _
    $region39: #{tpu_custom_call.1} parent=1 // pred_check_branch
      %1510 = sbr.rel (0) target = $region41
    $region40: #{tpu_custom_call.1} parent=1 // pred_region
      %1512 = dma.done [#allocation4], 16
    $region41: #{tpu_custom_call.1} parent=1 // pred_fallthru
      _
    %1513 = sfence
    %1514 = vsyncpa [#allocation3], 1
    %1515 = vsyncpa [#allocation6], 1
    %1516 = vsyncpa [#allocation9], 1
    %1517 = vsyncpa [#allocation4], 1

</llo_original>
